<compile_context>
chip_gen: v5e
topology: v5e:2x2
jax: 0.10.0
libtpu: 0.0.40
codegen_flags: <defaults>
</compile_context>

<pallas_src>
import jax
import jax.numpy as jnp
from jax.experimental import pallas as pl
from jax.experimental.pallas import tpu as pltpu

# --- synthetic, small "vit_base_patch32_224"-shaped config (toy dims) ---------
PATCH  = 16
IMG    = 32
CIN    = 3
D      = 32            # hidden size
HEADS  = 4
DH     = D // HEADS
MLP    = 64
DEPTH  = 12            # the forward hooks / aux path expect exactly 12 blocks
NCLS   = 10
GRID_P = IMG // PATCH
NPATCH = GRID_P * GRID_P
TOKENS = NPATCH + 1    # + cls token
CPP    = CIN * PATCH * PATCH
LN_EPS = 1e-6
DTYPE  = jnp.float32
WDTYPE = jnp.bfloat16  # matmul-operand storage dtype (f32 accumulation on MXU)
NEG    = -1e30         # additive mask value blocking cross-image attention


# ----------------------------- Pallas kernel ----------------------------------
def _ln(x, g, b):
    mean = jnp.mean(x, axis=-1, keepdims=True)
    var = jnp.mean(jnp.square(x - mean), axis=-1, keepdims=True)
    return (x - mean) * jax.lax.rsqrt(var + LN_EPS) * g + b


def _fused_vit_kernel(xp_ref, pw_ref, base_ref, bias_ref,
                      ln1_g_ref, ln1_b_ref, qkv_w_ref, qkv_b_ref,
                      proj_w_ref, proj_b_ref, ln2_g_ref, ln2_b_ref,
                      fc1_w_ref, fc1_b_ref, fc2_w_ref, fc2_b_ref,
                      norm_g_ref, norm_b_ref, head_w_ref, head_b_ref,
                      hooks_ref, feats_ref, x_sc):
    d = pl.program_id(0)

    # Grid step 0: patch-embed matmul seeds the residual stream.  `xp` has a
    # zero row at every cls position, so base (= cls + pos + patch bias) plus
    # one (BT, CPP) @ (CPP, D) matmul yields the token embeddings with no
    # in-kernel scatter or reshape.  The stream then stays resident in VMEM.
    @pl.when(d == 0)
    def _():
        x_sc[...] = base_ref[...] + jnp.dot(
            xp_ref[...], pw_ref[...], preferred_element_type=jnp.float32)

    x = x_sc[...]                                              # (BT, D) f32

    # ---- multi-head self-attention (pre-norm) ----
    h = _ln(x, ln1_g_ref[0], ln1_b_ref[0])
    qkv = jnp.dot(h.astype(WDTYPE), qkv_w_ref[0],
                  preferred_element_type=jnp.float32) + qkv_b_ref[0]   # (BT, 3D)
    qkvb = qkv.astype(WDTYPE)                                  # cast once

    scale = DH ** -0.5
    bias = bias_ref[...]                                       # (BT, BT) additive mask
    heads = []
    for hd in range(HEADS):                                    # static lane slices
        qh = qkvb[:, hd * DH:(hd + 1) * DH]
        kh = qkvb[:, D + hd * DH:D + (hd + 1) * DH]
        vh = qkvb[:, 2 * D + hd * DH:2 * D + (hd + 1) * DH]
        # q @ k^T over all rows; bias blocks attention across different images.
        s = jax.lax.dot_general(qh, kh, (((1,), (1,)), ((), ())),
                                preferred_element_type=jnp.float32)
        s = s * scale + bias
        s = s - jnp.max(s, axis=-1, keepdims=True)
        p = jnp.exp(s)
        p = p * pl.reciprocal(jnp.sum(p, axis=-1, keepdims=True), approx=True)
        heads.append(jnp.dot(p.astype(WDTYPE), vh,
                             preferred_element_type=jnp.float32))
    a = jnp.concatenate(heads, axis=-1)                        # (BT, D)

    x = x + jnp.dot(a.astype(WDTYPE), proj_w_ref[0],
                    preferred_element_type=jnp.float32) + proj_b_ref[0]

    # ---- MLP (pre-norm) ----
    h2 = _ln(x, ln2_g_ref[0], ln2_b_ref[0])
    h2 = jnp.dot(h2.astype(WDTYPE), fc1_w_ref[0],
                 preferred_element_type=jnp.float32) + fc1_b_ref[0]
    h2 = 0.5 * h2 * (1.0 + jax.lax.erf(h2 * (2.0 ** -0.5)))    # exact (erf) GELU
    x = x + jnp.dot(h2.astype(WDTYPE), fc2_w_ref[0],
                    preferred_element_type=jnp.float32) + fc2_b_ref[0]

    x_sc[...] = x
    hooks_ref[0] = x.astype(hooks_ref.dtype)                   # forward-hook capture

    # ---- final LayerNorm + classification head, fused into the last step ----
    @pl.when(d == DEPTH - 1)
    def _():
        hn = _ln(x, norm_g_ref[...], norm_b_ref[...])
        feats_ref[...] = (jnp.dot(hn.astype(WDTYPE), head_w_ref[...],
                                  preferred_element_type=jnp.float32)
                          + head_b_ref[...]).astype(feats_ref.dtype)


# --------------------------- pallas_call wrapper --------------------------------
def _run_vit(params, xp, base, attn_bias):
    """Patch embed + all DEPTH blocks + final norm/head in ONE pallas_call.

    Returns (hooks: (DEPTH, BT, D), feats_all: (BT, NCLS))."""
    BT = xp.shape[0]
    blk = params["blk"]

    def per_block(a):      # stream the d-th block's weights each grid step
        return pl.BlockSpec((1,) + a.shape[1:], lambda d: (d, 0, 0))

    def const2d(a):        # VMEM-resident across the whole grid (DMA'd once)
        return pl.BlockSpec(a.shape, lambda d: (0, 0))

    norm_g = params["norm_g"].reshape(1, D)
    norm_b = params["norm_b"].reshape(1, D)
    head_w = params["head_w"]
    head_b = params["head_b"].reshape(1, NCLS)

    blk_keys = ("ln1_g", "ln1_b", "qkv_w", "qkv_b", "proj_w", "proj_b",
                "ln2_g", "ln2_b", "fc1_w", "fc1_b", "fc2_w", "fc2_b")
    inputs = ((xp, params["patch_w"], base, attn_bias)
              + tuple(blk[k] for k in blk_keys)
              + (norm_g, norm_b, head_w, head_b))
    in_specs = ([const2d(xp), const2d(params["patch_w"]),
                 const2d(base), const2d(attn_bias)]
                + [per_block(blk[k]) for k in blk_keys]
                + [const2d(norm_g), const2d(norm_b),
                   const2d(head_w), const2d(head_b)])

    hooks, feats = pl.pallas_call(
        _fused_vit_kernel,
        out_shape=(jax.ShapeDtypeStruct((DEPTH, BT, D), DTYPE),
                   jax.ShapeDtypeStruct((BT, NCLS), DTYPE)),
        grid=(DEPTH,),
        in_specs=in_specs,
        out_specs=[pl.BlockSpec((1, BT, D), lambda d: (d, 0, 0)),
                   pl.BlockSpec((BT, NCLS), lambda d: (0, 0))],
        scratch_shapes=[pltpu.VMEM((BT, D), jnp.float32)],
        compiler_params=pltpu.CompilerParams(
            dimension_semantics=("arbitrary",)),
    )(*inputs)
    return hooks, feats


# ------------------------------ ViT forward ------------------------------------
def _extract_patches(x_nchw):
    # conv(kernel=stride=PATCH) as patch flatten + matmul; weight layout matches
    # a (D, C, P, P) conv weight flattened row-major to (C*P*P, D).
    B, C, H, W = x_nchw.shape
    p = x_nchw.reshape(B, C, H // PATCH, PATCH, W // PATCH, PATCH)
    p = p.transpose(0, 2, 4, 1, 3, 5)                          # (B, gh, gw, C, P, P)
    return p.reshape(B, NPATCH, C * PATCH * PATCH)


@jax.jit
def vit_forward(params, x_nchw):
    """Equivalent of ViTFeatureExtractor.forward: (features, {12 block outputs})."""
    B = x_nchw.shape[0]
    patches = _extract_patches(x_nchw)                         # (B, NPATCH, CPP)

    # Insert a zero row at every cls-token position so a single (BT, CPP) matmul
    # inside the fused kernel produces the patch-embed part of the token stream.
    zero_row = jnp.zeros((B, 1, CPP), DTYPE)
    xp = jnp.concatenate([zero_row, patches], axis=1)          # (B, T, CPP)
    xp = xp.reshape(B * TOKENS, CPP).astype(WDTYPE)

    # cls token, patch-embed bias and positional embedding folded into "base":
    # base[r] = cls + pos[0]            at cls rows
    #           patch_b + pos[tok(r)]   at patch rows
    cls = jnp.broadcast_to(params["cls"], (B, 1, D))
    pbias = jnp.broadcast_to(params["patch_b"].reshape(1, 1, D), (B, NPATCH, D))
    base = (jnp.concatenate([cls, pbias], axis=1) + params["pos"])
    base = base.reshape(B * TOKENS, D).astype(DTYPE)

    # additive attention mask: tokens may only attend within their own image
    img_id = jnp.repeat(jnp.arange(B, dtype=jnp.int32), TOKENS)
    attn_bias = jnp.where(img_id[:, None] == img_id[None, :], 0.0, NEG).astype(DTYPE)

    hooks, feats_all = _run_vit(params, xp, base, attn_bias)

    feats = feats_all.reshape(B, TOKENS, NCLS)[:, 0, :]        # cls-token head
    outputs = {f"transformer_{i}": hooks[i].reshape(B, TOKENS, D)
               for i in range(DEPTH)}
    return feats, outputs


def vit_model_forward(params, x, aux_imgs=None):
    """Equivalent of ViTModel.forward."""
    if aux_imgs is None:
        return vit_forward(params, x)

    B = x.shape[0]
    n_aux = aux_imgs.shape[1]
    # Batch main + aux images into a single ViT forward (one fused kernel run).
    aux_t = jnp.transpose(aux_imgs, (1, 0, 2, 3, 4))           # (n_aux, B, C, H, W)
    combined = jnp.concatenate([x[None], aux_t], axis=0)       # (1+n_aux, B, C, H, W)
    combined = combined.reshape((1 + n_aux) * B, *x.shape[1:])
    _, outs = vit_forward(params, combined)

    imgs = []
    for idx in range(DEPTH):
        h = outs[f"transformer_{idx}"].reshape(1 + n_aux, B, TOKENS, D)
        # torch.cat((global, aux_0, aux_1, ..., aux_{n-1}), dim=-1)
        imgs.append(jnp.concatenate([h[g] for g in range(1 + n_aux)], axis=-1))
    return imgs


# ------------------------------ parameters --------------------------------------
def init_vit_params(key):
    # TODO(synk): no pretrained timm checkpoint is loaded; deterministic random init.
    def nrm(k, shape, scale=0.02, dtype=DTYPE):
        return (scale * jax.random.normal(k, shape, dtype=jnp.float32)).astype(dtype)

    keys = jax.random.split(key, 8)
    params = {
        "patch_w": nrm(keys[0], (CPP, D), dtype=WDTYPE),
        "patch_b": jnp.zeros((D,), DTYPE),
        "cls":     nrm(keys[1], (1, 1, D)),
        "pos":     nrm(keys[2], (1, TOKENS, D)),
        "norm_g":  jnp.ones((D,), DTYPE),
        "norm_b":  jnp.zeros((D,), DTYPE),
        "head_w":  nrm(keys[3], (D, NCLS), dtype=WDTYPE),
        "head_b":  jnp.zeros((NCLS,), DTYPE),
        # per-block parameters stacked along a leading DEPTH axis so the fused
        # kernel can stream them via block-indexed BlockSpecs
        "blk": {
            "ln1_g": jnp.ones((DEPTH, 1, D), DTYPE),
            "ln1_b": jnp.zeros((DEPTH, 1, D), DTYPE),
            "qkv_w": nrm(keys[4], (DEPTH, D, 3 * D), dtype=WDTYPE),
            "qkv_b": jnp.zeros((DEPTH, 1, 3 * D), DTYPE),
            "proj_w": nrm(keys[5], (DEPTH, D, D), dtype=WDTYPE),
            "proj_b": jnp.zeros((DEPTH, 1, D), DTYPE),
            "ln2_g": jnp.ones((DEPTH, 1, D), DTYPE),
            "ln2_b": jnp.zeros((DEPTH, 1, D), DTYPE),
            "fc1_w": nrm(keys[6], (DEPTH, D, MLP), dtype=WDTYPE),
            "fc1_b": jnp.zeros((DEPTH, 1, MLP), DTYPE),
            "fc2_w": nrm(keys[7], (DEPTH, MLP, D), dtype=WDTYPE),
            "fc2_b": jnp.zeros((DEPTH, 1, D), DTYPE),
        },
    }
    return params


# --------------------------------- main ------------------------------------------
if __name__ == "__main__":
    key = jax.random.PRNGKey(0)
    kp, kx, ka = jax.random.split(key, 3)
    params = init_vit_params(kp)

    x = jax.random.normal(kx, (2, CIN, IMG, IMG), dtype=DTYPE)            # NCHW
    aux_imgs = jax.random.normal(ka, (2, 3, CIN, IMG, IMG), dtype=DTYPE)

    # aux_imgs=None path: (features, {12 block outputs})
    feats, outs = vit_model_forward(params, x)
    jax.block_until_ready((feats, outs))
    assert feats.shape == (2, NCLS)
    assert len(outs) == DEPTH
    assert outs["transformer_0"].shape == (2, TOKENS, D)

    # aux path: list of 12 tensors, each concat of 4 block outputs along last dim
    imgs = vit_model_forward(params, x, aux_imgs)
    imgs = jax.block_until_ready(imgs)
    assert len(imgs) == DEPTH
    assert all(t.shape == (2, TOKENS, 4 * D) for t in imgs)

    print("KERNEL_OK")
</pallas_src>

<mosaic_0001>
module attributes {stable_mosaic.version = 11 : i64} {
  func.func @_fused_vit_kernel(%arg0: i32, %arg1: memref<10x768xbf16, #tpu.memory_space<vmem>>, %arg2: memref<768x32xbf16, #tpu.memory_space<vmem>>, %arg3: memref<10x32xf32, #tpu.memory_space<vmem>>, %arg4: memref<10x10xf32, #tpu.memory_space<vmem>>, %arg5: memref<1x1x32xf32, #tpu.memory_space<vmem>>, %arg6: memref<1x1x32xf32, #tpu.memory_space<vmem>>, %arg7: memref<1x32x96xbf16, #tpu.memory_space<vmem>>, %arg8: memref<1x1x96xf32, #tpu.memory_space<vmem>>, %arg9: memref<1x32x32xbf16, #tpu.memory_space<vmem>>, %arg10: memref<1x1x32xf32, #tpu.memory_space<vmem>>, %arg11: memref<1x1x32xf32, #tpu.memory_space<vmem>>, %arg12: memref<1x1x32xf32, #tpu.memory_space<vmem>>, %arg13: memref<1x32x64xbf16, #tpu.memory_space<vmem>>, %arg14: memref<1x1x64xf32, #tpu.memory_space<vmem>>, %arg15: memref<1x64x32xbf16, #tpu.memory_space<vmem>>, %arg16: memref<1x1x32xf32, #tpu.memory_space<vmem>>, %arg17: memref<1x32xf32, #tpu.memory_space<vmem>>, %arg18: memref<1x32xf32, #tpu.memory_space<vmem>>, %arg19: memref<32x10xbf16, #tpu.memory_space<vmem>>, %arg20: memref<1x10xf32, #tpu.memory_space<vmem>>, %arg21: memref<1x10x32xf32, #tpu.memory_space<vmem>>, %arg22: memref<10x10xf32, #tpu.memory_space<vmem>>, %arg23: memref<10x32xf32, #tpu.memory_space<vmem>>) attributes {dimension_semantics = [#tpu.dimension_semantics<arbitrary>], iteration_bounds = array<i64: 12>, scalar_prefetch = 0 : i64, scratch_operands = 1 : i64, tpu.core_type = #tpu.core_type<tc>, window_params = [{pipeline_mode = #tpu.pipeline_mode<synchronous>, transform_indices = @transform_0, window_bounds = array<i64: 10, 768>}, {pipeline_mode = #tpu.pipeline_mode<synchronous>, transform_indices = @transform_1, window_bounds = array<i64: 768, 32>}, {pipeline_mode = #tpu.pipeline_mode<synchronous>, transform_indices = @transform_2, window_bounds = array<i64: 10, 32>}, {pipeline_mode = #tpu.pipeline_mode<synchronous>, transform_indices = @transform_3, window_bounds = array<i64: 10, 10>}, {transform_indices = @transform_4, window_bounds = array<i64: 1, 1, 32>}, {transform_indices = @transform_5, window_bounds = array<i64: 1, 1, 32>}, {transform_indices = @transform_6, window_bounds = array<i64: 1, 32, 96>}, {transform_indices = @transform_7, window_bounds = array<i64: 1, 1, 96>}, {transform_indices = @transform_8, window_bounds = array<i64: 1, 32, 32>}, {transform_indices = @transform_9, window_bounds = array<i64: 1, 1, 32>}, {transform_indices = @transform_10, window_bounds = array<i64: 1, 1, 32>}, {transform_indices = @transform_11, window_bounds = array<i64: 1, 1, 32>}, {transform_indices = @transform_12, window_bounds = array<i64: 1, 32, 64>}, {transform_indices = @transform_13, window_bounds = array<i64: 1, 1, 64>}, {transform_indices = @transform_14, window_bounds = array<i64: 1, 64, 32>}, {transform_indices = @transform_15, window_bounds = array<i64: 1, 1, 32>}, {pipeline_mode = #tpu.pipeline_mode<synchronous>, transform_indices = @transform_16, window_bounds = array<i64: 1, 32>}, {pipeline_mode = #tpu.pipeline_mode<synchronous>, transform_indices = @transform_17, window_bounds = array<i64: 1, 32>}, {pipeline_mode = #tpu.pipeline_mode<synchronous>, transform_indices = @transform_18, window_bounds = array<i64: 32, 10>}, {pipeline_mode = #tpu.pipeline_mode<synchronous>, transform_indices = @transform_19, window_bounds = array<i64: 1, 10>}, {transform_indices = @transform_20, window_bounds = array<i64: 1, 10, 32>}, {pipeline_mode = #tpu.pipeline_mode<synchronous>, transform_indices = @transform_21, window_bounds = array<i64: 10, 10>}]} {
    %c0_i32 = arith.constant 0 : i32
    %0 = arith.cmpi eq, %arg0, %c0_i32 : i32
    %1 = arith.extui %0 : i1 to i32
    %c0_i32_0 = arith.constant 0 : i32
    %2 = arith.cmpi ne, %1, %c0_i32_0 : i32
    scf.if %2 {
      %c0_82 = arith.constant 0 : index
      %c0_83 = arith.constant 0 : index
      %184 = vector.load %arg3[%c0_82, %c0_83] : memref<10x32xf32, #tpu.memory_space<vmem>>, vector<10x32xf32>
      %c0_84 = arith.constant 0 : index
      %c0_85 = arith.constant 0 : index
      %185 = vector.load %arg1[%c0_84, %c0_85] : memref<10x768xbf16, #tpu.memory_space<vmem>>, vector<10x768xbf16>
      %c0_86 = arith.constant 0 : index
      %c0_87 = arith.constant 0 : index
      %186 = vector.load %arg2[%c0_86, %c0_87] : memref<768x32xbf16, #tpu.memory_space<vmem>>, vector<768x32xbf16>
      %cst_88 = arith.constant dense<0.000000e+00> : vector<10x32xf32>
      %187 = tpu.matmul %185, %186, %cst_88 {dimension_numbers = #tpu.dot_dimension_numbers<[1], [0], [0], [1], [0, 0, 1, 1], [], []>} : vector<10x768xbf16>, vector<768x32xbf16>, vector<10x32xf32> -> vector<10x32xf32>
      %188 = arith.addf %184, %187 : vector<10x32xf32>
      %c0_89 = arith.constant 0 : index
      %c0_90 = arith.constant 0 : index
      %189 = vector.load %arg23[%c0_89, %c0_90] : memref<10x32xf32, #tpu.memory_space<vmem>>, vector<10x32xf32>
      tpu.vector_store %arg23[%c0_89, %c0_90], %188 {strides = array<i32>} : memref<10x32xf32, #tpu.memory_space<vmem>>, vector<10x32xf32>,
    } else {
    }
    %c0 = arith.constant 0 : index
    %c0_1 = arith.constant 0 : index
    %3 = vector.load %arg23[%c0, %c0_1] : memref<10x32xf32, #tpu.memory_space<vmem>>, vector<10x32xf32>
    %c0_2 = arith.constant 0 : index
    %c0_3 = arith.constant 0 : index
    %c0_4 = arith.constant 0 : index
    %4 = vector.load %arg5[%c0_2, %c0_3, %c0_4] : memref<1x1x32xf32, #tpu.memory_space<vmem>>, vector<1x1x32xf32>
    %5 = vector.shape_cast %4 : vector<1x1x32xf32> to vector<1x32xf32>
    %c0_5 = arith.constant 0 : index
    %c0_6 = arith.constant 0 : index
    %c0_7 = arith.constant 0 : index
    %6 = vector.load %arg6[%c0_5, %c0_6, %c0_7] : memref<1x1x32xf32, #tpu.memory_space<vmem>>, vector<1x1x32xf32>
    %7 = vector.shape_cast %6 : vector<1x1x32xf32> to vector<1x32xf32>
    %cst = arith.constant dense<0.000000e+00> : vector<10xf32>
    %8 = vector.multi_reduction <add>, %3, %cst [1] : vector<10x32xf32> to vector<10xf32>
    %9 = vector.shape_cast %8 : vector<10xf32> to vector<10x1xf32>
    %cst_8 = arith.constant 3.200000e+01 : f32
    %10 = vector.broadcast %cst_8 : f32 to vector<10x1xf32>
    %11 = arith.divf %9, %10 : vector<10x1xf32>
    %12 = vector.broadcast %11 : vector<10x1xf32> to vector<10x32xf32>
    %13 = arith.subf %3, %12 : vector<10x32xf32>
    %14 = arith.mulf %13, %13 : vector<10x32xf32>
    %cst_9 = arith.constant dense<0.000000e+00> : vector<10xf32>
    %15 = vector.multi_reduction <add>, %14, %cst_9 [1] : vector<10x32xf32> to vector<10xf32>
    %16 = vector.shape_cast %15 : vector<10xf32> to vector<10x1xf32>
    %cst_10 = arith.constant 3.200000e+01 : f32
    %17 = vector.broadcast %cst_10 : f32 to vector<10x1xf32>
    %18 = arith.divf %16, %17 : vector<10x1xf32>
    %19 = vector.broadcast %11 : vector<10x1xf32> to vector<10x32xf32>
    %20 = arith.subf %3, %19 : vector<10x32xf32>
    %cst_11 = arith.constant 9.99999997E-7 : f32
    %21 = vector.broadcast %cst_11 : f32 to vector<10x1xf32>
    %22 = arith.addf %18, %21 : vector<10x1xf32>
    %23 = math.rsqrt %22 : vector<10x1xf32>
    %24 = vector.broadcast %23 : vector<10x1xf32> to vector<10x32xf32>
    %25 = arith.mulf %20, %24 : vector<10x32xf32>
    %26 = vector.broadcast %5 : vector<1x32xf32> to vector<10x32xf32>
    %27 = arith.mulf %25, %26 : vector<10x32xf32>
    %28 = vector.broadcast %7 : vector<1x32xf32> to vector<10x32xf32>
    %29 = arith.addf %27, %28 : vector<10x32xf32>
    %30 = arith.truncf %29 : vector<10x32xf32> to vector<10x32xbf16>
    %c0_12 = arith.constant 0 : index
    %c0_13 = arith.constant 0 : index
    %c0_14 = arith.constant 0 : index
    %31 = vector.load %arg7[%c0_12, %c0_13, %c0_14] : memref<1x32x96xbf16, #tpu.memory_space<vmem>>, vector<1x32x96xbf16>
    %32 = vector.shape_cast %31 : vector<1x32x96xbf16> to vector<32x96xbf16>
    %cst_15 = arith.constant dense<0.000000e+00> : vector<10x96xf32>
    %33 = tpu.matmul %30, %32, %cst_15 {dimension_numbers = #tpu.dot_dimension_numbers<[1], [0], [0], [1], [0, 0, 1, 1], [], []>} : vector<10x32xbf16>, vector<32x96xbf16>, vector<10x96xf32> -> vector<10x96xf32>
    %c0_16 = arith.constant 0 : index
    %c0_17 = arith.constant 0 : index
    %c0_18 = arith.constant 0 : index
    %34 = vector.load %arg8[%c0_16, %c0_17, %c0_18] : memref<1x1x96xf32, #tpu.memory_space<vmem>>, vector<1x1x96xf32>
    %35 = vector.shape_cast %34 : vector<1x1x96xf32> to vector<1x96xf32>
    %36 = vector.broadcast %35 : vector<1x96xf32> to vector<10x96xf32>
    %37 = arith.addf %33, %36 : vector<10x96xf32>
    %38 = arith.truncf %37 : vector<10x96xf32> to vector<10x96xbf16>
    %c0_19 = arith.constant 0 : index
    %c0_20 = arith.constant 0 : index
    %39 = vector.load %arg4[%c0_19, %c0_20] : memref<10x10xf32, #tpu.memory_space<vmem>>, vector<10x10xf32>
    %40 = vector.extract_strided_slice %38 {offsets = [0, 0], sizes = [10, 8], strides = [1, 1]} : vector<10x96xbf16> to vector<10x8xbf16>
    %41 = vector.extract_strided_slice %38 {offsets = [0, 32], sizes = [10, 8], strides = [1, 1]} : vector<10x96xbf16> to vector<10x8xbf16>
    %42 = vector.extract_strided_slice %38 {offsets = [0, 64], sizes = [10, 8], strides = [1, 1]} : vector<10x96xbf16> to vector<10x8xbf16>
    %cst_21 = arith.constant dense<0.000000e+00> : vector<10x10xf32>
    %43 = tpu.matmul %40, %41, %cst_21 {dimension_numbers = #tpu.dot_dimension_numbers<[1], [1], [0], [0], [0, 0, 1, 0], [], []>} : vector<10x8xbf16>, vector<10x8xbf16>, vector<10x10xf32> -> vector<10x10xf32>
    %cst_22 = arith.constant 0.353553385 : f32
    %44 = vector.broadcast %cst_22 : f32 to vector<10x10xf32>
    %45 = arith.mulf %43, %44 : vector<10x10xf32>
    %46 = arith.addf %45, %39 : vector<10x10xf32>
    %cst_23 = arith.constant dense<0xFF800000> : vector<10xf32>
    %47 = vector.multi_reduction <maximumf>, %46, %cst_23 [1] : vector<10x10xf32> to vector<10xf32>
    %48 = vector.shape_cast %47 : vector<10xf32> to vector<10x1xf32>
    %49 = vector.broadcast %48 : vector<10x1xf32> to vector<10x10xf32>
    %50 = arith.subf %46, %49 : vector<10x10xf32>
    %51 = math.exp %50 : vector<10x10xf32>
    %cst_24 = arith.constant dense<0.000000e+00> : vector<10xf32>
    %52 = vector.multi_reduction <add>, %51, %cst_24 [1] : vector<10x10xf32> to vector<10xf32>
    %53 = vector.shape_cast %52 : vector<10xf32> to vector<10x1xf32>
    %54 = tpu.reciprocal %53 {approx = true} : vector<10x1xf32> -> vector<10x1xf32>
    %55 = vector.broadcast %54 : vector<10x1xf32> to vector<10x10xf32>
    %56 = arith.mulf %51, %55 : vector<10x10xf32>
    %57 = arith.truncf %56 : vector<10x10xf32> to vector<10x10xbf16>
    %cst_25 = arith.constant dense<0.000000e+00> : vector<10x8xf32>
    %58 = tpu.matmul %57, %42, %cst_25 {dimension_numbers = #tpu.dot_dimension_numbers<[1], [0], [0], [1], [0, 0, 1, 1], [], []>} : vector<10x10xbf16>, vector<10x8xbf16>, vector<10x8xf32> -> vector<10x8xf32>
    %59 = vector.extract_strided_slice %38 {offsets = [0, 8], sizes = [10, 8], strides = [1, 1]} : vector<10x96xbf16> to vector<10x8xbf16>
    %60 = vector.extract_strided_slice %38 {offsets = [0, 40], sizes = [10, 8], strides = [1, 1]} : vector<10x96xbf16> to vector<10x8xbf16>
    %61 = vector.extract_strided_slice %38 {offsets = [0, 72], sizes = [10, 8], strides = [1, 1]} : vector<10x96xbf16> to vector<10x8xbf16>
    %cst_26 = arith.constant dense<0.000000e+00> : vector<10x10xf32>
    %62 = tpu.matmul %59, %60, %cst_26 {dimension_numbers = #tpu.dot_dimension_numbers<[1], [1], [0], [0], [0, 0, 1, 0], [], []>} : vector<10x8xbf16>, vector<10x8xbf16>, vector<10x10xf32> -> vector<10x10xf32>
    %cst_27 = arith.constant 0.353553385 : f32
    %63 = vector.broadcast %cst_27 : f32 to vector<10x10xf32>
    %64 = arith.mulf %62, %63 : vector<10x10xf32>
    %65 = arith.addf %64, %39 : vector<10x10xf32>
    %cst_28 = arith.constant dense<0xFF800000> : vector<10xf32>
    %66 = vector.multi_reduction <maximumf>, %65, %cst_28 [1] : vector<10x10xf32> to vector<10xf32>
    %67 = vector.shape_cast %66 : vector<10xf32> to vector<10x1xf32>
    %68 = vector.broadcast %67 : vector<10x1xf32> to vector<10x10xf32>
    %69 = arith.subf %65, %68 : vector<10x10xf32>
    %70 = math.exp %69 : vector<10x10xf32>
    %cst_29 = arith.constant dense<0.000000e+00> : vector<10xf32>
    %71 = vector.multi_reduction <add>, %70, %cst_29 [1] : vector<10x10xf32> to vector<10xf32>
    %72 = vector.shape_cast %71 : vector<10xf32> to vector<10x1xf32>
    %73 = tpu.reciprocal %72 {approx = true} : vector<10x1xf32> -> vector<10x1xf32>
    %74 = vector.broadcast %73 : vector<10x1xf32> to vector<10x10xf32>
    %75 = arith.mulf %70, %74 : vector<10x10xf32>
    %76 = arith.truncf %75 : vector<10x10xf32> to vector<10x10xbf16>
    %cst_30 = arith.constant dense<0.000000e+00> : vector<10x8xf32>
    %77 = tpu.matmul %76, %61, %cst_30 {dimension_numbers = #tpu.dot_dimension_numbers<[1], [0], [0], [1], [0, 0, 1, 1], [], []>} : vector<10x10xbf16>, vector<10x8xbf16>, vector<10x8xf32> -> vector<10x8xf32>
    %78 = vector.extract_strided_slice %38 {offsets = [0, 16], sizes = [10, 8], strides = [1, 1]} : vector<10x96xbf16> to vector<10x8xbf16>
    %79 = vector.extract_strided_slice %38 {offsets = [0, 48], sizes = [10, 8], strides = [1, 1]} : vector<10x96xbf16> to vector<10x8xbf16>
    %80 = vector.extract_strided_slice %38 {offsets = [0, 80], sizes = [10, 8], strides = [1, 1]} : vector<10x96xbf16> to vector<10x8xbf16>
    %cst_31 = arith.constant dense<0.000000e+00> : vector<10x10xf32>
    %81 = tpu.matmul %78, %79, %cst_31 {dimension_numbers = #tpu.dot_dimension_numbers<[1], [1], [0], [0], [0, 0, 1, 0], [], []>} : vector<10x8xbf16>, vector<10x8xbf16>, vector<10x10xf32> -> vector<10x10xf32>
    %cst_32 = arith.constant 0.353553385 : f32
    %82 = vector.broadcast %cst_32 : f32 to vector<10x10xf32>
    %83 = arith.mulf %81, %82 : vector<10x10xf32>
    %84 = arith.addf %83, %39 : vector<10x10xf32>
    %cst_33 = arith.constant dense<0xFF800000> : vector<10xf32>
    %85 = vector.multi_reduction <maximumf>, %84, %cst_33 [1] : vector<10x10xf32> to vector<10xf32>
    %86 = vector.shape_cast %85 : vector<10xf32> to vector<10x1xf32>
    %87 = vector.broadcast %86 : vector<10x1xf32> to vector<10x10xf32>
    %88 = arith.subf %84, %87 : vector<10x10xf32>
    %89 = math.exp %88 : vector<10x10xf32>
    %cst_34 = arith.constant dense<0.000000e+00> : vector<10xf32>
    %90 = vector.multi_reduction <add>, %89, %cst_34 [1] : vector<10x10xf32> to vector<10xf32>
    %91 = vector.shape_cast %90 : vector<10xf32> to vector<10x1xf32>
    %92 = tpu.reciprocal %91 {approx = true} : vector<10x1xf32> -> vector<10x1xf32>
    %93 = vector.broadcast %92 : vector<10x1xf32> to vector<10x10xf32>
    %94 = arith.mulf %89, %93 : vector<10x10xf32>
    %95 = arith.truncf %94 : vector<10x10xf32> to vector<10x10xbf16>
    %cst_35 = arith.constant dense<0.000000e+00> : vector<10x8xf32>
    %96 = tpu.matmul %95, %80, %cst_35 {dimension_numbers = #tpu.dot_dimension_numbers<[1], [0], [0], [1], [0, 0, 1, 1], [], []>} : vector<10x10xbf16>, vector<10x8xbf16>, vector<10x8xf32> -> vector<10x8xf32>
    %97 = vector.extract_strided_slice %38 {offsets = [0, 24], sizes = [10, 8], strides = [1, 1]} : vector<10x96xbf16> to vector<10x8xbf16>
    %98 = vector.extract_strided_slice %38 {offsets = [0, 56], sizes = [10, 8], strides = [1, 1]} : vector<10x96xbf16> to vector<10x8xbf16>
    %99 = vector.extract_strided_slice %38 {offsets = [0, 88], sizes = [10, 8], strides = [1, 1]} : vector<10x96xbf16> to vector<10x8xbf16>
    %cst_36 = arith.constant dense<0.000000e+00> : vector<10x10xf32>
    %100 = tpu.matmul %97, %98, %cst_36 {dimension_numbers = #tpu.dot_dimension_numbers<[1], [1], [0], [0], [0, 0, 1, 0], [], []>} : vector<10x8xbf16>, vector<10x8xbf16>, vector<10x10xf32> -> vector<10x10xf32>
    %cst_37 = arith.constant 0.353553385 : f32
    %101 = vector.broadcast %cst_37 : f32 to vector<10x10xf32>
    %102 = arith.mulf %100, %101 : vector<10x10xf32>
    %103 = arith.addf %102, %39 : vector<10x10xf32>
    %cst_38 = arith.constant dense<0xFF800000> : vector<10xf32>
    %104 = vector.multi_reduction <maximumf>, %103, %cst_38 [1] : vector<10x10xf32> to vector<10xf32>
    %105 = vector.shape_cast %104 : vector<10xf32> to vector<10x1xf32>
    %106 = vector.broadcast %105 : vector<10x1xf32> to vector<10x10xf32>
    %107 = arith.subf %103, %106 : vector<10x10xf32>
    %108 = math.exp %107 : vector<10x10xf32>
    %cst_39 = arith.constant dense<0.000000e+00> : vector<10xf32>
    %109 = vector.multi_reduction <add>, %108, %cst_39 [1] : vector<10x10xf32> to vector<10xf32>
    %110 = vector.shape_cast %109 : vector<10xf32> to vector<10x1xf32>
    %111 = tpu.reciprocal %110 {approx = true} : vector<10x1xf32> -> vector<10x1xf32>
    %112 = vector.broadcast %111 : vector<10x1xf32> to vector<10x10xf32>
    %113 = arith.mulf %108, %112 : vector<10x10xf32>
    %114 = arith.truncf %113 : vector<10x10xf32> to vector<10x10xbf16>
    %cst_40 = arith.constant dense<0.000000e+00> : vector<10x8xf32>
    %115 = tpu.matmul %114, %99, %cst_40 {dimension_numbers = #tpu.dot_dimension_numbers<[1], [0], [0], [1], [0, 0, 1, 1], [], []>} : vector<10x10xbf16>, vector<10x8xbf16>, vector<10x8xf32> -> vector<10x8xf32>
    %116 = tpu.concatenate %58, %77, %96, %115 in 1 : vector<10x8xf32>, vector<10x8xf32>, vector<10x8xf32>, vector<10x8xf32> -> vector<10x32xf32>
    %117 = arith.truncf %116 : vector<10x32xf32> to vector<10x32xbf16>
    %c0_41 = arith.constant 0 : index
    %c0_42 = arith.constant 0 : index
    %c0_43 = arith.constant 0 : index
    %118 = vector.load %arg9[%c0_41, %c0_42, %c0_43] : memref<1x32x32xbf16, #tpu.memory_space<vmem>>, vector<1x32x32xbf16>
    %119 = vector.shape_cast %118 : vector<1x32x32xbf16> to vector<32x32xbf16>
    %cst_44 = arith.constant dense<0.000000e+00> : vector<10x32xf32>
    %120 = tpu.matmul %117, %119, %cst_44 {dimension_numbers = #tpu.dot_dimension_numbers<[1], [0], [0], [1], [0, 0, 1, 1], [], []>} : vector<10x32xbf16>, vector<32x32xbf16>, vector<10x32xf32> -> vector<10x32xf32>
    %121 = arith.addf %3, %120 : vector<10x32xf32>
    %c0_45 = arith.constant 0 : index
    %c0_46 = arith.constant 0 : index
    %c0_47 = arith.constant 0 : index
    %122 = vector.load %arg10[%c0_45, %c0_46, %c0_47] : memref<1x1x32xf32, #tpu.memory_space<vmem>>, vector<1x1x32xf32>
    %123 = vector.shape_cast %122 : vector<1x1x32xf32> to vector<1x32xf32>
    %124 = vector.broadcast %123 : vector<1x32xf32> to vector<10x32xf32>
    %125 = arith.addf %121, %124 : vector<10x32xf32>
    %c0_48 = arith.constant 0 : index
    %c0_49 = arith.constant 0 : index
    %c0_50 = arith.constant 0 : index
    %126 = vector.load %arg11[%c0_48, %c0_49, %c0_50] : memref<1x1x32xf32, #tpu.memory_space<vmem>>, vector<1x1x32xf32>
    %127 = vector.shape_cast %126 : vector<1x1x32xf32> to vector<1x32xf32>
    %c0_51 = arith.constant 0 : index
    %c0_52 = arith.constant 0 : index
    %c0_53 = arith.constant 0 : index
    %128 = vector.load %arg12[%c0_51, %c0_52, %c0_53] : memref<1x1x32xf32, #tpu.memory_space<vmem>>, vector<1x1x32xf32>
    %129 = vector.shape_cast %128 : vector<1x1x32xf32> to vector<1x32xf32>
    %cst_54 = arith.constant dense<0.000000e+00> : vector<10xf32>
    %130 = vector.multi_reduction <add>, %125, %cst_54 [1] : vector<10x32xf32> to vector<10xf32>
    %131 = vector.shape_cast %130 : vector<10xf32> to vector<10x1xf32>
    %cst_55 = arith.constant 3.200000e+01 : f32
    %132 = vector.broadcast %cst_55 : f32 to vector<10x1xf32>
    %133 = arith.divf %131, %132 : vector<10x1xf32>
    %134 = vector.broadcast %133 : vector<10x1xf32> to vector<10x32xf32>
    %135 = arith.subf %125, %134 : vector<10x32xf32>
    %136 = arith.mulf %135, %135 : vector<10x32xf32>
    %cst_56 = arith.constant dense<0.000000e+00> : vector<10xf32>
    %137 = vector.multi_reduction <add>, %136, %cst_56 [1] : vector<10x32xf32> to vector<10xf32>
    %138 = vector.shape_cast %137 : vector<10xf32> to vector<10x1xf32>
    %cst_57 = arith.constant 3.200000e+01 : f32
    %139 = vector.broadcast %cst_57 : f32 to vector<10x1xf32>
    %140 = arith.divf %138, %139 : vector<10x1xf32>
    %141 = vector.broadcast %133 : vector<10x1xf32> to vector<10x32xf32>
    %142 = arith.subf %125, %141 : vector<10x32xf32>
    %cst_58 = arith.constant 9.99999997E-7 : f32
    %143 = vector.broadcast %cst_58 : f32 to vector<10x1xf32>
    %144 = arith.addf %140, %143 : vector<10x1xf32>
    %145 = math.rsqrt %144 : vector<10x1xf32>
    %146 = vector.broadcast %145 : vector<10x1xf32> to vector<10x32xf32>
    %147 = arith.mulf %142, %146 : vector<10x32xf32>
    %148 = vector.broadcast %127 : vector<1x32xf32> to vector<10x32xf32>
    %149 = arith.mulf %147, %148 : vector<10x32xf32>
    %150 = vector.broadcast %129 : vector<1x32xf32> to vector<10x32xf32>
    %151 = arith.addf %149, %150 : vector<10x32xf32>
    %152 = arith.truncf %151 : vector<10x32xf32> to vector<10x32xbf16>
    %c0_59 = arith.constant 0 : index
    %c0_60 = arith.constant 0 : index
    %c0_61 = arith.constant 0 : index
    %153 = vector.load %arg13[%c0_59, %c0_60, %c0_61] : memref<1x32x64xbf16, #tpu.memory_space<vmem>>, vector<1x32x64xbf16>
    %154 = vector.shape_cast %153 : vector<1x32x64xbf16> to vector<32x64xbf16>
    %cst_62 = arith.constant dense<0.000000e+00> : vector<10x64xf32>
    %155 = tpu.matmul %152, %154, %cst_62 {dimension_numbers = #tpu.dot_dimension_numbers<[1], [0], [0], [1], [0, 0, 1, 1], [], []>} : vector<10x32xbf16>, vector<32x64xbf16>, vector<10x64xf32> -> vector<10x64xf32>
    %c0_63 = arith.constant 0 : index
    %c0_64 = arith.constant 0 : index
    %c0_65 = arith.constant 0 : index
    %156 = vector.load %arg14[%c0_63, %c0_64, %c0_65] : memref<1x1x64xf32, #tpu.memory_space<vmem>>, vector<1x1x64xf32>
    %157 = vector.shape_cast %156 : vector<1x1x64xf32> to vector<1x64xf32>
    %158 = vector.broadcast %157 : vector<1x64xf32> to vector<10x64xf32>
    %159 = arith.addf %155, %158 : vector<10x64xf32>
    %cst_66 = arith.constant 5.000000e-01 : f32
    %160 = vector.broadcast %cst_66 : f32 to vector<10x64xf32>
    %161 = arith.mulf %160, %159 : vector<10x64xf32>
    %cst_67 = arith.constant 0.707106769 : f32
    %162 = vector.broadcast %cst_67 : f32 to vector<10x64xf32>
    %163 = arith.mulf %159, %162 : vector<10x64xf32>
    %164 = math.erf %163 : vector<10x64xf32>
    %cst_68 = arith.constant 1.000000e+00 : f32
    %165 = vector.broadcast %cst_68 : f32 to vector<10x64xf32>
    %166 = arith.addf %165, %164 : vector<10x64xf32>
    %167 = arith.mulf %161, %166 : vector<10x64xf32>
    %168 = arith.truncf %167 : vector<10x64xf32> to vector<10x64xbf16>
    %c0_69 = arith.constant 0 : index
    %c0_70 = arith.constant 0 : index
    %c0_71 = arith.constant 0 : index
    %169 = vector.load %arg15[%c0_69, %c0_70, %c0_71] : memref<1x64x32xbf16, #tpu.memory_space<vmem>>, vector<1x64x32xbf16>
    %170 = vector.shape_cast %169 : vector<1x64x32xbf16> to vector<64x32xbf16>
    %cst_72 = arith.constant dense<0.000000e+00> : vector<10x32xf32>
    %171 = tpu.matmul %168, %170, %cst_72 {dimension_numbers = #tpu.dot_dimension_numbers<[1], [0], [0], [1], [0, 0, 1, 1], [], []>} : vector<10x64xbf16>, vector<64x32xbf16>, vector<10x32xf32> -> vector<10x32xf32>
    %172 = arith.addf %125, %171 : vector<10x32xf32>
    %c0_73 = arith.constant 0 : index
    %c0_74 = arith.constant 0 : index
    %c0_75 = arith.constant 0 : index
    %173 = vector.load %arg16[%c0_73, %c0_74, %c0_75] : memref<1x1x32xf32, #tpu.memory_space<vmem>>, vector<1x1x32xf32>
    %174 = vector.shape_cast %173 : vector<1x1x32xf32> to vector<1x32xf32>
    %175 = vector.broadcast %174 : vector<1x32xf32> to vector<10x32xf32>
    %176 = arith.addf %172, %175 : vector<10x32xf32>
    %c0_76 = arith.constant 0 : index
    %c0_77 = arith.constant 0 : index
    %177 = vector.load %arg23[%c0_76, %c0_77] : memref<10x32xf32, #tpu.memory_space<vmem>>, vector<10x32xf32>
    tpu.vector_store %arg23[%c0_76, %c0_77], %176 {strides = array<i32>} : memref<10x32xf32, #tpu.memory_space<vmem>>, vector<10x32xf32>,
    %c0_78 = arith.constant 0 : index
    %c0_79 = arith.constant 0 : index
    %c0_80 = arith.constant 0 : index
    %178 = vector.load %arg21[%c0_78, %c0_79, %c0_80] : memref<1x10x32xf32, #tpu.memory_space<vmem>>, vector<1x10x32xf32>
    %179 = vector.shape_cast %178 : vector<1x10x32xf32> to vector<10x32xf32>
    %180 = vector.shape_cast %176 : vector<10x32xf32> to vector<1x10x32xf32>
    tpu.vector_store %arg21[%c0_78, %c0_79, %c0_80], %180 {strides = array<i32>} : memref<1x10x32xf32, #tpu.memory_space<vmem>>, vector<1x10x32xf32>,
    %c11_i32 = arith.constant 11 : i32
    %181 = arith.cmpi eq, %arg0, %c11_i32 : i32
    %182 = arith.extui %181 : i1 to i32
    %c0_i32_81 = arith.constant 0 : i32
    %183 = arith.cmpi ne, %182, %c0_i32_81 : i32
    scf.if %183 {
      %c0_82 = arith.constant 0 : index
      %c0_83 = arith.constant 0 : index
      %184 = vector.load %arg17[%c0_82, %c0_83] : memref<1x32xf32, #tpu.memory_space<vmem>>, vector<1x32xf32>
      %c0_84 = arith.constant 0 : index
      %c0_85 = arith.constant 0 : index
      %185 = vector.load %arg18[%c0_84, %c0_85] : memref<1x32xf32, #tpu.memory_space<vmem>>, vector<1x32xf32>
      %cst_86 = arith.constant dense<0.000000e+00> : vector<10xf32>
      %186 = vector.multi_reduction <add>, %176, %cst_86 [1] : vector<10x32xf32> to vector<10xf32>
      %187 = vector.shape_cast %186 : vector<10xf32> to vector<10x1xf32>
      %cst_87 = arith.constant 3.200000e+01 : f32
      %188 = vector.broadcast %cst_87 : f32 to vector<10x1xf32>
      %189 = arith.divf %187, %188 : vector<10x1xf32>
      %190 = vector.broadcast %189 : vector<10x1xf32> to vector<10x32xf32>
      %191 = arith.subf %176, %190 : vector<10x32xf32>
      %192 = arith.mulf %191, %191 : vector<10x32xf32>
      %cst_88 = arith.constant dense<0.000000e+00> : vector<10xf32>
      %193 = vector.multi_reduction <add>, %192, %cst_88 [1] : vector<10x32xf32> to vector<10xf32>
      %194 = vector.shape_cast %193 : vector<10xf32> to vector<10x1xf32>
      %cst_89 = arith.constant 3.200000e+01 : f32
      %195 = vector.broadcast %cst_89 : f32 to vector<10x1xf32>
      %196 = arith.divf %194, %195 : vector<10x1xf32>
      %197 = vector.broadcast %189 : vector<10x1xf32> to vector<10x32xf32>
      %198 = arith.subf %176, %197 : vector<10x32xf32>
      %cst_90 = arith.constant 9.99999997E-7 : f32
      %199 = vector.broadcast %cst_90 : f32 to vector<10x1xf32>
      %200 = arith.addf %196, %199 : vector<10x1xf32>
      %201 = math.rsqrt %200 : vector<10x1xf32>
      %202 = vector.broadcast %201 : vector<10x1xf32> to vector<10x32xf32>
      %203 = arith.mulf %198, %202 : vector<10x32xf32>
      %204 = vector.broadcast %184 : vector<1x32xf32> to vector<10x32xf32>
      %205 = arith.mulf %203, %204 : vector<10x32xf32>
      %206 = vector.broadcast %185 : vector<1x32xf32> to vector<10x32xf32>
      %207 = arith.addf %205, %206 : vector<10x32xf32>
      %208 = arith.truncf %207 : vector<10x32xf32> to vector<10x32xbf16>
      %c0_91 = arith.constant 0 : index
      %c0_92 = arith.constant 0 : index
      %209 = vector.load %arg19[%c0_91, %c0_92] : memref<32x10xbf16, #tpu.memory_space<vmem>>, vector<32x10xbf16>
      %cst_93 = arith.constant dense<0.000000e+00> : vector<10x10xf32>
      %210 = tpu.matmul %208, %209, %cst_93 {dimension_numbers = #tpu.dot_dimension_numbers<[1], [0], [0], [1], [0, 0, 1, 1], [], []>} : vector<10x32xbf16>, vector<32x10xbf16>, vector<10x10xf32> -> vector<10x10xf32>
      %c0_94 = arith.constant 0 : index
      %c0_95 = arith.constant 0 : index
      %211 = vector.load %arg20[%c0_94, %c0_95] : memref<1x10xf32, #tpu.memory_space<vmem>>, vector<1x10xf32>
      %212 = vector.broadcast %211 : vector<1x10xf32> to vector<10x10xf32>
      %213 = arith.addf %210, %212 : vector<10x10xf32>
      %c0_96 = arith.constant 0 : index
      %c0_97 = arith.constant 0 : index
      %214 = vector.load %arg22[%c0_96, %c0_97] : memref<10x10xf32, #tpu.memory_space<vmem>>, vector<10x10xf32>
      tpu.vector_store %arg22[%c0_96, %c0_97], %213 {strides = array<i32>} : memref<10x10xf32, #tpu.memory_space<vmem>>, vector<10x10xf32>,
    } else {
    }
    return
  }
  func.func @transform_0(%arg0: i32) -> (i32, i32) {
    %c0_i32 = arith.constant 0 : i32
    %c0_i32_0 = arith.constant 0 : i32
    %c0_i32_1 = arith.constant 0 : i32
    return %c0_i32, %c0_i32_0 : i32, i32
  }
  func.func @transform_1(%arg0: i32) -> (i32, i32) {
    %c0_i32 = arith.constant 0 : i32
    %c0_i32_0 = arith.constant 0 : i32
    %c0_i32_1 = arith.constant 0 : i32
    return %c0_i32, %c0_i32_0 : i32, i32
  }
  func.func @transform_2(%arg0: i32) -> (i32, i32) {
    %c0_i32 = arith.constant 0 : i32
    %c0_i32_0 = arith.constant 0 : i32
    %c0_i32_1 = arith.constant 0 : i32
    return %c0_i32, %c0_i32_0 : i32, i32
  }
  func.func @transform_3(%arg0: i32) -> (i32, i32) {
    %c0_i32 = arith.constant 0 : i32
    %c0_i32_0 = arith.constant 0 : i32
    %c0_i32_1 = arith.constant 0 : i32
    return %c0_i32, %c0_i32_0 : i32, i32
  }
  func.func @transform_4(%arg0: i32) -> (i32, i32, i32) {
    %c0_i32 = arith.constant 0 : i32
    %c0_i32_0 = arith.constant 0 : i32
    %c0_i32_1 = arith.constant 0 : i32
    return %arg0, %c0_i32, %c0_i32_0 : i32, i32, i32
  }
  func.func @transform_5(%arg0: i32) -> (i32, i32, i32) {
    %c0_i32 = arith.constant 0 : i32
    %c0_i32_0 = arith.constant 0 : i32
    %c0_i32_1 = arith.constant 0 : i32
    return %arg0, %c0_i32, %c0_i32_0 : i32, i32, i32
  }
  func.func @transform_6(%arg0: i32) -> (i32, i32, i32) {
    %c0_i32 = arith.constant 0 : i32
    %c0_i32_0 = arith.constant 0 : i32
    %c0_i32_1 = arith.constant 0 : i32
    return %arg0, %c0_i32, %c0_i32_0 : i32, i32, i32
  }
  func.func @transform_7(%arg0: i32) -> (i32, i32, i32) {
    %c0_i32 = arith.constant 0 : i32
    %c0_i32_0 = arith.constant 0 : i32
    %c0_i32_1 = arith.constant 0 : i32
    return %arg0, %c0_i32, %c0_i32_0 : i32, i32, i32
  }
  func.func @transform_8(%arg0: i32) -> (i32, i32, i32) {
    %c0_i32 = arith.constant 0 : i32
    %c0_i32_0 = arith.constant 0 : i32
    %c0_i32_1 = arith.constant 0 : i32
    return %arg0, %c0_i32, %c0_i32_0 : i32, i32, i32
  }
  func.func @transform_9(%arg0: i32) -> (i32, i32, i32) {
    %c0_i32 = arith.constant 0 : i32
    %c0_i32_0 = arith.constant 0 : i32
    %c0_i32_1 = arith.constant 0 : i32
    return %arg0, %c0_i32, %c0_i32_0 : i32, i32, i32
  }
  func.func @transform_10(%arg0: i32) -> (i32, i32, i32) {
    %c0_i32 = arith.constant 0 : i32
    %c0_i32_0 = arith.constant 0 : i32
    %c0_i32_1 = arith.constant 0 : i32
    return %arg0, %c0_i32, %c0_i32_0 : i32, i32, i32
  }
  func.func @transform_11(%arg0: i32) -> (i32, i32, i32) {
    %c0_i32 = arith.constant 0 : i32
    %c0_i32_0 = arith.constant 0 : i32
    %c0_i32_1 = arith.constant 0 : i32
    return %arg0, %c0_i32, %c0_i32_0 : i32, i32, i32
  }
  func.func @transform_12(%arg0: i32) -> (i32, i32, i32) {
    %c0_i32 = arith.constant 0 : i32
    %c0_i32_0 = arith.constant 0 : i32
    %c0_i32_1 = arith.constant 0 : i32
    return %arg0, %c0_i32, %c0_i32_0 : i32, i32, i32
  }
  func.func @transform_13(%arg0: i32) -> (i32, i32, i32) {
    %c0_i32 = arith.constant 0 : i32
    %c0_i32_0 = arith.constant 0 : i32
    %c0_i32_1 = arith.constant 0 : i32
    return %arg0, %c0_i32, %c0_i32_0 : i32, i32, i32
  }
  func.func @transform_14(%arg0: i32) -> (i32, i32, i32) {
    %c0_i32 = arith.constant 0 : i32
    %c0_i32_0 = arith.constant 0 : i32
    %c0_i32_1 = arith.constant 0 : i32
    return %arg0, %c0_i32, %c0_i32_0 : i32, i32, i32
  }
  func.func @transform_15(%arg0: i32) -> (i32, i32, i32) {
    %c0_i32 = arith.constant 0 : i32
    %c0_i32_0 = arith.constant 0 : i32
    %c0_i32_1 = arith.constant 0 : i32
    return %arg0, %c0_i32, %c0_i32_0 : i32, i32, i32
  }
  func.func @transform_16(%arg0: i32) -> (i32, i32) {
    %c0_i32 = arith.constant 0 : i32
    %c0_i32_0 = arith.constant 0 : i32
    %c0_i32_1 = arith.constant 0 : i32
    return %c0_i32, %c0_i32_0 : i32, i32
  }
  func.func @transform_17(%arg0: i32) -> (i32, i32) {
    %c0_i32 = arith.constant 0 : i32
    %c0_i32_0 = arith.constant 0 : i32
    %c0_i32_1 = arith.constant 0 : i32
    return %c0_i32, %c0_i32_0 : i32, i32
  }
  func.func @transform_18(%arg0: i32) -> (i32, i32) {
    %c0_i32 = arith.constant 0 : i32
    %c0_i32_0 = arith.constant 0 : i32
    %c0_i32_1 = arith.constant 0 : i32
    return %c0_i32, %c0_i32_0 : i32, i32
  }
  func.func @transform_19(%arg0: i32) -> (i32, i32) {
    %c0_i32 = arith.constant 0 : i32
    %c0_i32_0 = arith.constant 0 : i32
    %c0_i32_1 = arith.constant 0 : i32
    return %c0_i32, %c0_i32_0 : i32, i32
  }
  func.func @transform_20(%arg0: i32) -> (i32, i32, i32) {
    %c0_i32 = arith.constant 0 : i32
    %c0_i32_0 = arith.constant 0 : i32
    %c0_i32_1 = arith.constant 0 : i32
    return %arg0, %c0_i32, %c0_i32_0 : i32, i32, i32
  }
  func.func @transform_21(%arg0: i32) -> (i32, i32) {
    %c0_i32 = arith.constant 0 : i32
    %c0_i32_0 = arith.constant 0 : i32
    %c0_i32_1 = arith.constant 0 : i32
    return %c0_i32, %c0_i32_0 : i32, i32
  }
}

</mosaic_0001>

<llo_original>
// kernel: eq.8
$region0: #{eq.8}
  %s0 = inlined_call_operand.vmem [shape: s32[2,5], index: 0, kind: input, shape index: {}]
  %s1 = inlined_call_operand.vmem [shape: s32[10], index: 1, kind: output, shape index: {}]
  $region1: #{eq.8} parent=0
    #allocation0 [shape = 'u8[4096]{0}', space=vmem, size = 0x1000, scoped, tag = 'scoped mem for output reshape']
    #allocation1 [shape = 'u8[4096]{0}', space=vmem, size = 0x1000, scoped, tag = 'scoped mem for input reshape']
    %s3 = ssub.s32 4, 1
    %v4 = vld [vmem:[%s0] sm:%s3]
    %5 = vst [vmem:[#allocation1] sm:%s3] %v4
    %v6 = vld [vmem:[#allocation1] sm:$0x1]
    %vm7 = vcmask 39936
    %8 = vst.msk [vmem:[#allocation0] sm:$0x1] %vm7, %v6
    %s9 = scalar_lea.vmem [#allocation1], 1
    %v10 = vld [vmem:[%s9] sm:$0x1]
    %11 = vrot.lane.b32.xlu0 %v10, 5
    %v12 = vpop.permute.xlu0 %11
    %vm13 = vcmask 80936
    %14 = vst.msk [vmem:[#allocation0] sm:$0x1] %vm13, %v12
    %s16 = ssub.s32 2, 1
    %v17 = vld [vmem:[#allocation0] sm:%s16]
    %s19 = ssub.s32 2, 1
    %20 = vst [vmem:[%s1] sm:%s19] %v17

// kernel: squeeze.23
$region0: #{squeeze.23}
  %s0 = inlined_call_operand.vmem [shape: f32[1,10,32], index: 0, kind: input, shape index: {}]
  %s1 = inlined_call_operand.vmem [shape: f32[2,5,32], index: 1, kind: output, shape index: {}]
  %v2 = vld [vmem:[%s0] sm:$0xff]
  %vm3 = vcmask 261120
  %4 = vst.msk [vmem:[%s1] sm:$0x1f] %vm3, %v2
  %s5 = scalar_lea.vmem %s1, 3
  %6 = vst.msk [vmem:[%s5] sm:$0xe0] %vm3, %v2
  %s7 = scalar_lea.vmem %s0, 8
  %v8 = vld [vmem:[%s7] sm:$0x3]
  %vm9 = vcmask 261120
  %s10 = scalar_lea.vmem %s1, 11
  %11 = vst.msk [vmem:[%s10] sm:$0x3] %vm9, %v8

// kernel: vit_forward.1
$region0: #{vit_forward.1}
  #allocation0 [shape = 'u32[]', space=smem, size = 0x4, offset = 0x4, fixed_abs, tag = 'smem constant byte address 0x4 - core index']
  #allocation1 [shape = 'u32[72,128]{1,0:T(1,128)}', space=vmem, size = 0x9000, scoped, tag = 'internal scratch']
  #allocation2 [shape = 'f32[10,32]{1,0:T(8,128)}', space=vmem, size = 0x2000, scoped, tag = 'scratch operand']
  %s0 = inlined_call_operand.vmem [shape: bf16[10,768], index: 0, kind: input, shape index: {}]
  %s1 = inlined_call_operand.vmem [shape: bf16[768,32], index: 1, kind: input, shape index: {}]
  %s2 = inlined_call_operand.vmem [shape: f32[10,32], index: 2, kind: input, shape index: {}]
  %s3 = inlined_call_operand.vmem [shape: f32[10,10], index: 3, kind: input, shape index: {}]
  %s4 = inlined_call_operand.vmem [shape: f32[12,1,32], index: 4, kind: input, shape index: {}]
  %s5 = inlined_call_operand.vmem [shape: f32[12,1,32], index: 5, kind: input, shape index: {}]
  %s6 = inlined_call_operand.vmem [shape: bf16[12,32,96], index: 6, kind: input, shape index: {}]
  %s7 = inlined_call_operand.vmem [shape: f32[12,1,96], index: 7, kind: input, shape index: {}]
  %s8 = inlined_call_operand.vmem [shape: bf16[12,32,32], index: 8, kind: input, shape index: {}]
  %s9 = inlined_call_operand.vmem [shape: f32[12,1,32], index: 9, kind: input, shape index: {}]
  %s10 = inlined_call_operand.vmem [shape: f32[12,1,32], index: 10, kind: input, shape index: {}]
  %s11 = inlined_call_operand.vmem [shape: f32[12,1,32], index: 11, kind: input, shape index: {}]
  %s12 = inlined_call_operand.vmem [shape: bf16[12,32,64], index: 12, kind: input, shape index: {}]
  %s13 = inlined_call_operand.vmem [shape: f32[12,1,64], index: 13, kind: input, shape index: {}]
  %s14 = inlined_call_operand.vmem [shape: bf16[12,64,32], index: 14, kind: input, shape index: {}]
  %s15 = inlined_call_operand.vmem [shape: f32[12,1,32], index: 15, kind: input, shape index: {}]
  %s16 = inlined_call_operand.vmem [shape: f32[1,32], index: 16, kind: input, shape index: {}]
  %s17 = inlined_call_operand.vmem [shape: f32[1,32], index: 17, kind: input, shape index: {}]
  %s18 = inlined_call_operand.vmem [shape: bf16[32,10], index: 18, kind: input, shape index: {}]
  %s19 = inlined_call_operand.vmem [shape: f32[1,10], index: 19, kind: input, shape index: {}]
  %s20 = inlined_call_operand.vmem [shape: f32[12,10,32], index: 20, kind: output, shape index: {0}]
  %s21 = inlined_call_operand.vmem [shape: f32[10,10], index: 21, kind: output, shape index: {1}]
  %22 = xla_tuple %s20, %s21
  %s23 = sld [smem:[#allocation0]]
  $region129: #{vit_forward.1} parent=0
    _
  %s25 = ssub.s32 1, %s23
  %s26 = scalar_select 0, %s25, %s23
  loop: start=0, step=1, limit=14
  $region2: #{vit_forward.1} parent=0 // loop_pre_header
    _
  $region3: #{vit_forward.1} parent=0 // loop_header
    %s28 = sphi 0, %s32
    %p29 = scmp.ge.s32.totalorder %s28, 14
    %s36 = sphi 0, %s36
    %s38 = sphi 0, %s36
    %s39 = sphi 0, %s38
    %s53 = sphi 0, %s39
    %s57 = sphi 0, %s57
    %s59 = sphi 0, %s57
    %s60 = sphi 0, %s59
    %s74 = sphi 0, %s60
    %s78 = sphi 0, %s78
    %s80 = sphi 0, %s78
    %s81 = sphi 0, %s80
    %s95 = sphi 0, %s81
    %s99 = sphi 0, %s99
    %s101 = sphi 0, %s99
    %s102 = sphi 0, %s101
    %s116 = sphi 0, %s102
    %s122 = sphi 0, %s124
    %s125 = sphi 0, %s122
    %s126 = sphi 0, %s125
    %s142 = sphi 0, %s126
    %s148 = sphi 0, %s150
    %s151 = sphi 0, %s148
    %s152 = sphi 0, %s151
    %s168 = sphi 0, %s152
    %s174 = sphi 0, %s176
    %s177 = sphi 0, %s174
    %s178 = sphi 0, %s177
    %s194 = sphi 0, %s178
    %s200 = sphi 0, %s202
    %s203 = sphi 0, %s200
    %s204 = sphi 0, %s203
    %s220 = sphi 0, %s204
    %s226 = sphi 0, %s228
    %s229 = sphi 0, %s226
    %s230 = sphi 0, %s229
    %s246 = sphi 0, %s230
    %s252 = sphi 0, %s254
    %s255 = sphi 0, %s252
    %s256 = sphi 0, %s255
    %s272 = sphi 0, %s256
    %s278 = sphi 0, %s280
    %s281 = sphi 0, %s278
    %s282 = sphi 0, %s281
    %s298 = sphi 0, %s282
    %s304 = sphi 0, %s306
    %s307 = sphi 0, %s304
    %s308 = sphi 0, %s307
    %s324 = sphi 0, %s308
    %s330 = sphi 0, %s332
    %s333 = sphi 0, %s330
    %s334 = sphi 0, %s333
    %s350 = sphi 0, %s334
    %s356 = sphi 0, %s358
    %s359 = sphi 0, %s356
    %s360 = sphi 0, %s359
    %s376 = sphi 0, %s360
    %s382 = sphi 0, %s384
    %s385 = sphi 0, %s382
    %s386 = sphi 0, %s385
    %s402 = sphi 0, %s386
    %s408 = sphi 0, %s410
    %s411 = sphi 0, %s408
    %s412 = sphi 0, %s411
    %s428 = sphi 0, %s412
    %s432 = sphi 0, %s432
    %s434 = sphi 0, %s432
    %s435 = sphi 0, %s434
    %s449 = sphi 0, %s435
    %s453 = sphi 0, %s453
    %s455 = sphi 0, %s453
    %s456 = sphi 0, %s455
    %s470 = sphi 0, %s456
    %s474 = sphi 0, %s474
    %s476 = sphi 0, %s474
    %s477 = sphi 0, %s476
    %s491 = sphi 0, %s477
    %s495 = sphi 0, %s495
    %s497 = sphi 0, %s495
    %s498 = sphi 0, %s497
    %s512 = sphi 0, %s498
    %s518 = sphi 0, %s520
    %s521 = sphi 0, %s518
    %s522 = sphi 0, %s521
    %s538 = sphi 0, %s522
    %s542 = sphi 0, %s542
    %s544 = sphi 0, %s542
    %s545 = sphi 0, %s544
    %s559 = sphi 0, %s545
  $region4: #{vit_forward.1} parent=0 // loop_header_branch
    %31 = sbr.rel (%p29) target = $region8
  $region5: #{vit_forward.1} parent=0 // loop_body
    %s33 = ssub.s32 %s28, 1
    %s34 = ssub.s32 %s28, 2
    %s35 = sadd.s32 %s28, 1
    %s37 = sadd.s32 %s36, 1
    %p40 = scmp.eq.s32.totalorder %s28, 11
    %p41 = scmp.ne.s32.totalorder %s36, %s38
    %p42 = scmp.eq.s32.totalorder %s28, 0
    %p43 = por %p41, %p42
    %p44 = scmp.ne.s32.totalorder %s36, %s38
    %p45 = scmp.eq.s32.totalorder %s33, 11
    %p46 = por %p44, %p45
    %p47 = scmp.ne.s32.totalorder %s38, %s39
    %p48 = scmp.eq.s32.totalorder %s33, 0
    %p49 = por %p47, %p48
    %p50 = scmp.ne.s32.totalorder %s38, %s39
    %p51 = scmp.eq.s32.totalorder %s34, 11
    %p52 = por %p50, %p51
    %p54 = scmp.ne.s32.totalorder %s39, %s53
    %p55 = scmp.eq.s32.totalorder %s34, 0
    %p56 = por %p54, %p55
    %s58 = sadd.s32 %s57, 1
    %p61 = scmp.eq.s32.totalorder %s28, 11
    %p62 = scmp.ne.s32.totalorder %s57, %s59
    %p63 = scmp.eq.s32.totalorder %s28, 0
    %p64 = por %p62, %p63
    %p65 = scmp.ne.s32.totalorder %s57, %s59
    %p66 = scmp.eq.s32.totalorder %s33, 11
    %p67 = por %p65, %p66
    %p68 = scmp.ne.s32.totalorder %s59, %s60
    %p69 = scmp.eq.s32.totalorder %s33, 0
    %p70 = por %p68, %p69
    %p71 = scmp.ne.s32.totalorder %s59, %s60
    %p72 = scmp.eq.s32.totalorder %s34, 11
    %p73 = por %p71, %p72
    %p75 = scmp.ne.s32.totalorder %s60, %s74
    %p76 = scmp.eq.s32.totalorder %s34, 0
    %p77 = por %p75, %p76
    %s79 = sadd.s32 %s78, 1
    %p82 = scmp.eq.s32.totalorder %s28, 11
    %p83 = scmp.ne.s32.totalorder %s78, %s80
    %p84 = scmp.eq.s32.totalorder %s28, 0
    %p85 = por %p83, %p84
    %p86 = scmp.ne.s32.totalorder %s78, %s80
    %p87 = scmp.eq.s32.totalorder %s33, 11
    %p88 = por %p86, %p87
    %p89 = scmp.ne.s32.totalorder %s80, %s81
    %p90 = scmp.eq.s32.totalorder %s33, 0
    %p91 = por %p89, %p90
    %p92 = scmp.ne.s32.totalorder %s80, %s81
    %p93 = scmp.eq.s32.totalorder %s34, 11
    %p94 = por %p92, %p93
    %p96 = scmp.ne.s32.totalorder %s81, %s95
    %p97 = scmp.eq.s32.totalorder %s34, 0
    %p98 = por %p96, %p97
    %s100 = sadd.s32 %s99, 1
    %p103 = scmp.eq.s32.totalorder %s28, 11
    %p104 = scmp.ne.s32.totalorder %s99, %s101
    %p105 = scmp.eq.s32.totalorder %s28, 0
    %p106 = por %p104, %p105
    %p107 = scmp.ne.s32.totalorder %s99, %s101
    %p108 = scmp.eq.s32.totalorder %s33, 11
    %p109 = por %p107, %p108
    %p110 = scmp.ne.s32.totalorder %s101, %s102
    %p111 = scmp.eq.s32.totalorder %s33, 0
    %p112 = por %p110, %p111
    %p113 = scmp.ne.s32.totalorder %s101, %s102
    %p114 = scmp.eq.s32.totalorder %s34, 11
    %p115 = por %p113, %p114
    %p117 = scmp.ne.s32.totalorder %s102, %s116
    %p118 = scmp.eq.s32.totalorder %s34, 0
    %p119 = por %p117, %p118
    %s120 = ssub.s32 %s28, %s35
    %p121 = scmp.eq.s32.totalorder %s120, 0
    %s123 = sadd.s32 %s122, 1
    %s124 = scalar_select %p121, %s122, %s123
    %p127 = pneg %p121
    %p128 = scmp.eq.s32.totalorder %s28, 11
    %p129 = por %p127, %p128
    %p130 = scmp.ne.s32.totalorder %s122, %s125
    %p131 = scmp.eq.s32.totalorder %s28, 0
    %p132 = por %p130, %p131
    %p133 = scmp.ne.s32.totalorder %s122, %s125
    %p134 = scmp.eq.s32.totalorder %s33, 11
    %p135 = por %p133, %p134
    %p136 = scmp.ne.s32.totalorder %s125, %s126
    %p137 = scmp.eq.s32.totalorder %s33, 0
    %p138 = por %p136, %p137
    %p139 = scmp.ne.s32.totalorder %s125, %s126
    %p140 = scmp.eq.s32.totalorder %s34, 11
    %p141 = por %p139, %p140
    %p143 = scmp.ne.s32.totalorder %s126, %s142
    %p144 = scmp.eq.s32.totalorder %s34, 0
    %p145 = por %p143, %p144
    %s146 = ssub.s32 %s28, %s35
    %p147 = scmp.eq.s32.totalorder %s146, 0
    %s149 = sadd.s32 %s148, 1
    %s150 = scalar_select %p147, %s148, %s149
    %p153 = pneg %p147
    %p154 = scmp.eq.s32.totalorder %s28, 11
    %p155 = por %p153, %p154
    %p156 = scmp.ne.s32.totalorder %s148, %s151
    %p157 = scmp.eq.s32.totalorder %s28, 0
    %p158 = por %p156, %p157
    %p159 = scmp.ne.s32.totalorder %s148, %s151
    %p160 = scmp.eq.s32.totalorder %s33, 11
    %p161 = por %p159, %p160
    %p162 = scmp.ne.s32.totalorder %s151, %s152
    %p163 = scmp.eq.s32.totalorder %s33, 0
    %p164 = por %p162, %p163
    %p165 = scmp.ne.s32.totalorder %s151, %s152
    %p166 = scmp.eq.s32.totalorder %s34, 11
    %p167 = por %p165, %p166
    %p169 = scmp.ne.s32.totalorder %s152, %s168
    %p170 = scmp.eq.s32.totalorder %s34, 0
    %p171 = por %p169, %p170
    %s172 = ssub.s32 %s28, %s35
    %p173 = scmp.eq.s32.totalorder %s172, 0
    %s175 = sadd.s32 %s174, 1
    %s176 = scalar_select %p173, %s174, %s175
    %p179 = pneg %p173
    %p180 = scmp.eq.s32.totalorder %s28, 11
    %p181 = por %p179, %p180
    %p182 = scmp.ne.s32.totalorder %s174, %s177
    %p183 = scmp.eq.s32.totalorder %s28, 0
    %p184 = por %p182, %p183
    %p185 = scmp.ne.s32.totalorder %s174, %s177
    %p186 = scmp.eq.s32.totalorder %s33, 11
    %p187 = por %p185, %p186
    %p188 = scmp.ne.s32.totalorder %s177, %s178
    %p189 = scmp.eq.s32.totalorder %s33, 0
    %p190 = por %p188, %p189
    %p191 = scmp.ne.s32.totalorder %s177, %s178
    %p192 = scmp.eq.s32.totalorder %s34, 11
    %p193 = por %p191, %p192
    %p195 = scmp.ne.s32.totalorder %s178, %s194
    %p196 = scmp.eq.s32.totalorder %s34, 0
    %p197 = por %p195, %p196
    %s198 = ssub.s32 %s28, %s35
    %p199 = scmp.eq.s32.totalorder %s198, 0
    %s201 = sadd.s32 %s200, 1
    %s202 = scalar_select %p199, %s200, %s201
    %p205 = pneg %p199
    %p206 = scmp.eq.s32.totalorder %s28, 11
    %p207 = por %p205, %p206
    %p208 = scmp.ne.s32.totalorder %s200, %s203
    %p209 = scmp.eq.s32.totalorder %s28, 0
    %p210 = por %p208, %p209
    %p211 = scmp.ne.s32.totalorder %s200, %s203
    %p212 = scmp.eq.s32.totalorder %s33, 11
    %p213 = por %p211, %p212
    %p214 = scmp.ne.s32.totalorder %s203, %s204
    %p215 = scmp.eq.s32.totalorder %s33, 0
    %p216 = por %p214, %p215
    %p217 = scmp.ne.s32.totalorder %s203, %s204
    %p218 = scmp.eq.s32.totalorder %s34, 11
    %p219 = por %p217, %p218
    %p221 = scmp.ne.s32.totalorder %s204, %s220
    %p222 = scmp.eq.s32.totalorder %s34, 0
    %p223 = por %p221, %p222
    %s224 = ssub.s32 %s28, %s35
    %p225 = scmp.eq.s32.totalorder %s224, 0
    %s227 = sadd.s32 %s226, 1
    %s228 = scalar_select %p225, %s226, %s227
    %p231 = pneg %p225
    %p232 = scmp.eq.s32.totalorder %s28, 11
    %p233 = por %p231, %p232
    %p234 = scmp.ne.s32.totalorder %s226, %s229
    %p235 = scmp.eq.s32.totalorder %s28, 0
    %p236 = por %p234, %p235
    %p237 = scmp.ne.s32.totalorder %s226, %s229
    %p238 = scmp.eq.s32.totalorder %s33, 11
    %p239 = por %p237, %p238
    %p240 = scmp.ne.s32.totalorder %s229, %s230
    %p241 = scmp.eq.s32.totalorder %s33, 0
    %p242 = por %p240, %p241
    %p243 = scmp.ne.s32.totalorder %s229, %s230
    %p244 = scmp.eq.s32.totalorder %s34, 11
    %p245 = por %p243, %p244
    %p247 = scmp.ne.s32.totalorder %s230, %s246
    %p248 = scmp.eq.s32.totalorder %s34, 0
    %p249 = por %p247, %p248
    %s250 = ssub.s32 %s28, %s35
    %p251 = scmp.eq.s32.totalorder %s250, 0
    %s253 = sadd.s32 %s252, 1
    %s254 = scalar_select %p251, %s252, %s253
    %p257 = pneg %p251
    %p258 = scmp.eq.s32.totalorder %s28, 11
    %p259 = por %p257, %p258
    %p260 = scmp.ne.s32.totalorder %s252, %s255
    %p261 = scmp.eq.s32.totalorder %s28, 0
    %p262 = por %p260, %p261
    %p263 = scmp.ne.s32.totalorder %s252, %s255
    %p264 = scmp.eq.s32.totalorder %s33, 11
    %p265 = por %p263, %p264
    %p266 = scmp.ne.s32.totalorder %s255, %s256
    %p267 = scmp.eq.s32.totalorder %s33, 0
    %p268 = por %p266, %p267
    %p269 = scmp.ne.s32.totalorder %s255, %s256
    %p270 = scmp.eq.s32.totalorder %s34, 11
    %p271 = por %p269, %p270
    %p273 = scmp.ne.s32.totalorder %s256, %s272
    %p274 = scmp.eq.s32.totalorder %s34, 0
    %p275 = por %p273, %p274
    %s276 = ssub.s32 %s28, %s35
    %p277 = scmp.eq.s32.totalorder %s276, 0
    %s279 = sadd.s32 %s278, 1
    %s280 = scalar_select %p277, %s278, %s279
    %p283 = pneg %p277
    %p284 = scmp.eq.s32.totalorder %s28, 11
    %p285 = por %p283, %p284
    %p286 = scmp.ne.s32.totalorder %s278, %s281
    %p287 = scmp.eq.s32.totalorder %s28, 0
    %p288 = por %p286, %p287
    %p289 = scmp.ne.s32.totalorder %s278, %s281
    %p290 = scmp.eq.s32.totalorder %s33, 11
    %p291 = por %p289, %p290
    %p292 = scmp.ne.s32.totalorder %s281, %s282
    %p293 = scmp.eq.s32.totalorder %s33, 0
    %p294 = por %p292, %p293
    %p295 = scmp.ne.s32.totalorder %s281, %s282
    %p296 = scmp.eq.s32.totalorder %s34, 11
    %p297 = por %p295, %p296
    %p299 = scmp.ne.s32.totalorder %s282, %s298
    %p300 = scmp.eq.s32.totalorder %s34, 0
    %p301 = por %p299, %p300
    %s302 = ssub.s32 %s28, %s35
    %p303 = scmp.eq.s32.totalorder %s302, 0
    %s305 = sadd.s32 %s304, 1
    %s306 = scalar_select %p303, %s304, %s305
    %p309 = pneg %p303
    %p310 = scmp.eq.s32.totalorder %s28, 11
    %p311 = por %p309, %p310
    %p312 = scmp.ne.s32.totalorder %s304, %s307
    %p313 = scmp.eq.s32.totalorder %s28, 0
    %p314 = por %p312, %p313
    %p315 = scmp.ne.s32.totalorder %s304, %s307
    %p316 = scmp.eq.s32.totalorder %s33, 11
    %p317 = por %p315, %p316
    %p318 = scmp.ne.s32.totalorder %s307, %s308
    %p319 = scmp.eq.s32.totalorder %s33, 0
    %p320 = por %p318, %p319
    %p321 = scmp.ne.s32.totalorder %s307, %s308
    %p322 = scmp.eq.s32.totalorder %s34, 11
    %p323 = por %p321, %p322
    %p325 = scmp.ne.s32.totalorder %s308, %s324
    %p326 = scmp.eq.s32.totalorder %s34, 0
    %p327 = por %p325, %p326
    %s328 = ssub.s32 %s28, %s35
    %p329 = scmp.eq.s32.totalorder %s328, 0
    %s331 = sadd.s32 %s330, 1
    %s332 = scalar_select %p329, %s330, %s331
    %p335 = pneg %p329
    %p336 = scmp.eq.s32.totalorder %s28, 11
    %p337 = por %p335, %p336
    %p338 = scmp.ne.s32.totalorder %s330, %s333
    %p339 = scmp.eq.s32.totalorder %s28, 0
    %p340 = por %p338, %p339
    %p341 = scmp.ne.s32.totalorder %s330, %s333
    %p342 = scmp.eq.s32.totalorder %s33, 11
    %p343 = por %p341, %p342
    %p344 = scmp.ne.s32.totalorder %s333, %s334
    %p345 = scmp.eq.s32.totalorder %s33, 0
    %p346 = por %p344, %p345
    %p347 = scmp.ne.s32.totalorder %s333, %s334
    %p348 = scmp.eq.s32.totalorder %s34, 11
    %p349 = por %p347, %p348
    %p351 = scmp.ne.s32.totalorder %s334, %s350
    %p352 = scmp.eq.s32.totalorder %s34, 0
    %p353 = por %p351, %p352
    %s354 = ssub.s32 %s28, %s35
    %p355 = scmp.eq.s32.totalorder %s354, 0
    %s357 = sadd.s32 %s356, 1
    %s358 = scalar_select %p355, %s356, %s357
    %p361 = pneg %p355
    %p362 = scmp.eq.s32.totalorder %s28, 11
    %p363 = por %p361, %p362
    %p364 = scmp.ne.s32.totalorder %s356, %s359
    %p365 = scmp.eq.s32.totalorder %s28, 0
    %p366 = por %p364, %p365
    %p367 = scmp.ne.s32.totalorder %s356, %s359
    %p368 = scmp.eq.s32.totalorder %s33, 11
    %p369 = por %p367, %p368
    %p370 = scmp.ne.s32.totalorder %s359, %s360
    %p371 = scmp.eq.s32.totalorder %s33, 0
    %p372 = por %p370, %p371
    %p373 = scmp.ne.s32.totalorder %s359, %s360
    %p374 = scmp.eq.s32.totalorder %s34, 11
    %p375 = por %p373, %p374
    %p377 = scmp.ne.s32.totalorder %s360, %s376
    %p378 = scmp.eq.s32.totalorder %s34, 0
    %p379 = por %p377, %p378
    %s380 = ssub.s32 %s28, %s35
    %p381 = scmp.eq.s32.totalorder %s380, 0
    %s383 = sadd.s32 %s382, 1
    %s384 = scalar_select %p381, %s382, %s383
    %p387 = pneg %p381
    %p388 = scmp.eq.s32.totalorder %s28, 11
    %p389 = por %p387, %p388
    %p390 = scmp.ne.s32.totalorder %s382, %s385
    %p391 = scmp.eq.s32.totalorder %s28, 0
    %p392 = por %p390, %p391
    %p393 = scmp.ne.s32.totalorder %s382, %s385
    %p394 = scmp.eq.s32.totalorder %s33, 11
    %p395 = por %p393, %p394
    %p396 = scmp.ne.s32.totalorder %s385, %s386
    %p397 = scmp.eq.s32.totalorder %s33, 0
    %p398 = por %p396, %p397
    %p399 = scmp.ne.s32.totalorder %s385, %s386
    %p400 = scmp.eq.s32.totalorder %s34, 11
    %p401 = por %p399, %p400
    %p403 = scmp.ne.s32.totalorder %s386, %s402
    %p404 = scmp.eq.s32.totalorder %s34, 0
    %p405 = por %p403, %p404
    %s406 = ssub.s32 %s28, %s35
    %p407 = scmp.eq.s32.totalorder %s406, 0
    %s409 = sadd.s32 %s408, 1
    %s410 = scalar_select %p407, %s408, %s409
    %p413 = pneg %p407
    %p414 = scmp.eq.s32.totalorder %s28, 11
    %p415 = por %p413, %p414
    %p416 = scmp.ne.s32.totalorder %s408, %s411
    %p417 = scmp.eq.s32.totalorder %s28, 0
    %p418 = por %p416, %p417
    %p419 = scmp.ne.s32.totalorder %s408, %s411
    %p420 = scmp.eq.s32.totalorder %s33, 11
    %p421 = por %p419, %p420
    %p422 = scmp.ne.s32.totalorder %s411, %s412
    %p423 = scmp.eq.s32.totalorder %s33, 0
    %p424 = por %p422, %p423
    %p425 = scmp.ne.s32.totalorder %s411, %s412
    %p426 = scmp.eq.s32.totalorder %s34, 11
    %p427 = por %p425, %p426
    %p429 = scmp.ne.s32.totalorder %s412, %s428
    %p430 = scmp.eq.s32.totalorder %s34, 0
    %p431 = por %p429, %p430
    %s433 = sadd.s32 %s432, 1
    %p436 = scmp.eq.s32.totalorder %s28, 11
    %p437 = scmp.ne.s32.totalorder %s432, %s434
    %p438 = scmp.eq.s32.totalorder %s28, 0
    %p439 = por %p437, %p438
    %p440 = scmp.ne.s32.totalorder %s432, %s434
    %p441 = scmp.eq.s32.totalorder %s33, 11
    %p442 = por %p440, %p441
    %p443 = scmp.ne.s32.totalorder %s434, %s435
    %p444 = scmp.eq.s32.totalorder %s33, 0
    %p445 = por %p443, %p444
    %p446 = scmp.ne.s32.totalorder %s434, %s435
    %p447 = scmp.eq.s32.totalorder %s34, 11
    %p448 = por %p446, %p447
    %p450 = scmp.ne.s32.totalorder %s435, %s449
    %p451 = scmp.eq.s32.totalorder %s34, 0
    %p452 = por %p450, %p451
    %s454 = sadd.s32 %s453, 1
    %p457 = scmp.eq.s32.totalorder %s28, 11
    %p458 = scmp.ne.s32.totalorder %s453, %s455
    %p459 = scmp.eq.s32.totalorder %s28, 0
    %p460 = por %p458, %p459
    %p461 = scmp.ne.s32.totalorder %s453, %s455
    %p462 = scmp.eq.s32.totalorder %s33, 11
    %p463 = por %p461, %p462
    %p464 = scmp.ne.s32.totalorder %s455, %s456
    %p465 = scmp.eq.s32.totalorder %s33, 0
    %p466 = por %p464, %p465
    %p467 = scmp.ne.s32.totalorder %s455, %s456
    %p468 = scmp.eq.s32.totalorder %s34, 11
    %p469 = por %p467, %p468
    %p471 = scmp.ne.s32.totalorder %s456, %s470
    %p472 = scmp.eq.s32.totalorder %s34, 0
    %p473 = por %p471, %p472
    %s475 = sadd.s32 %s474, 1
    %p478 = scmp.eq.s32.totalorder %s28, 11
    %p479 = scmp.ne.s32.totalorder %s474, %s476
    %p480 = scmp.eq.s32.totalorder %s28, 0
    %p481 = por %p479, %p480
    %p482 = scmp.ne.s32.totalorder %s474, %s476
    %p483 = scmp.eq.s32.totalorder %s33, 11
    %p484 = por %p482, %p483
    %p485 = scmp.ne.s32.totalorder %s476, %s477
    %p486 = scmp.eq.s32.totalorder %s33, 0
    %p487 = por %p485, %p486
    %p488 = scmp.ne.s32.totalorder %s476, %s477
    %p489 = scmp.eq.s32.totalorder %s34, 11
    %p490 = por %p488, %p489
    %p492 = scmp.ne.s32.totalorder %s477, %s491
    %p493 = scmp.eq.s32.totalorder %s34, 0
    %p494 = por %p492, %p493
    %s496 = sadd.s32 %s495, 1
    %p499 = scmp.eq.s32.totalorder %s28, 11
    %p500 = scmp.ne.s32.totalorder %s495, %s497
    %p501 = scmp.eq.s32.totalorder %s28, 0
    %p502 = por %p500, %p501
    %p503 = scmp.ne.s32.totalorder %s495, %s497
    %p504 = scmp.eq.s32.totalorder %s33, 11
    %p505 = por %p503, %p504
    %p506 = scmp.ne.s32.totalorder %s497, %s498
    %p507 = scmp.eq.s32.totalorder %s33, 0
    %p508 = por %p506, %p507
    %p509 = scmp.ne.s32.totalorder %s497, %s498
    %p510 = scmp.eq.s32.totalorder %s34, 11
    %p511 = por %p509, %p510
    %p513 = scmp.ne.s32.totalorder %s498, %s512
    %p514 = scmp.eq.s32.totalorder %s34, 0
    %p515 = por %p513, %p514
    %s516 = ssub.s32 %s28, %s35
    %p517 = scmp.eq.s32.totalorder %s516, 0
    %s519 = sadd.s32 %s518, 1
    %s520 = scalar_select %p517, %s518, %s519
    %p523 = pneg %p517
    %p524 = scmp.eq.s32.totalorder %s28, 11
    %p525 = por %p523, %p524
    %p526 = scmp.ne.s32.totalorder %s518, %s521
    %p527 = scmp.eq.s32.totalorder %s28, 0
    %p528 = por %p526, %p527
    %p529 = scmp.ne.s32.totalorder %s518, %s521
    %p530 = scmp.eq.s32.totalorder %s33, 11
    %p531 = por %p529, %p530
    %p532 = scmp.ne.s32.totalorder %s521, %s522
    %p533 = scmp.eq.s32.totalorder %s33, 0
    %p534 = por %p532, %p533
    %p535 = scmp.ne.s32.totalorder %s521, %s522
    %p536 = scmp.eq.s32.totalorder %s34, 11
    %p537 = por %p535, %p536
    %p539 = scmp.ne.s32.totalorder %s522, %s538
    %p540 = scmp.eq.s32.totalorder %s34, 0
    %p541 = por %p539, %p540
    %s543 = sadd.s32 %s542, 1
    %p546 = scmp.eq.s32.totalorder %s28, 11
    %p547 = scmp.ne.s32.totalorder %s542, %s544
    %p548 = scmp.eq.s32.totalorder %s28, 0
    %p549 = por %p547, %p548
    %p550 = scmp.ne.s32.totalorder %s542, %s544
    %p551 = scmp.eq.s32.totalorder %s33, 11
    %p552 = por %p550, %p551
    %p553 = scmp.ne.s32.totalorder %s544, %s545
    %p554 = scmp.eq.s32.totalorder %s33, 0
    %p555 = por %p553, %p554
    %p556 = scmp.ne.s32.totalorder %s544, %s545
    %p557 = scmp.eq.s32.totalorder %s34, 11
    %p558 = por %p556, %p557
    %p560 = scmp.ne.s32.totalorder %s545, %s559
    %p561 = scmp.eq.s32.totalorder %s34, 0
    %p562 = por %p560, %p561
    %p563 = scmp.le.s32.totalorder 1, %s28
    %p564 = scmp.lt.s32.totalorder %s28, 13
    %p565 = pnand %p563, %p564
    %p566 = pneg %p565
    // Predicated region
    $region9: #{vit_forward.1} parent=5 // pred_check
      _
    $region10: #{vit_forward.1} parent=5 // pred_check_branch
      %568 = sbr.rel (%p565) target = $region12
    $region11: #{vit_forward.1} parent=5 // pred_region
      %s569 = ssub.s32 %s28, 1
      // Predicated region
      $region13: #{vit_forward.1} parent=11 // pred_check
        %p570 = pneg %p49
      $region14: #{vit_forward.1} parent=11 // pred_check_branch
        %572 = sbr.rel (%p570) target = $region16
      $region15: #{vit_forward.1} parent=11 // pred_region
        _
      $region16: #{vit_forward.1} parent=11 // pred_fallthru
        _
      // Predicated region
      $region17: #{vit_forward.1} parent=11 // pred_check
        %p573 = pneg %p70
      $region18: #{vit_forward.1} parent=11 // pred_check_branch
        %575 = sbr.rel (%p573) target = $region20
      $region19: #{vit_forward.1} parent=11 // pred_region
        _
      $region20: #{vit_forward.1} parent=11 // pred_fallthru
        _
      // Predicated region
      $region21: #{vit_forward.1} parent=11 // pred_check
        %p576 = pneg %p91
      $region22: #{vit_forward.1} parent=11 // pred_check_branch
        %578 = sbr.rel (%p576) target = $region24
      $region23: #{vit_forward.1} parent=11 // pred_region
        _
      $region24: #{vit_forward.1} parent=11 // pred_fallthru
        _
      // Predicated region
      $region25: #{vit_forward.1} parent=11 // pred_check
        %p579 = pneg %p112
      $region26: #{vit_forward.1} parent=11 // pred_check_branch
        %581 = sbr.rel (%p579) target = $region28
      $region27: #{vit_forward.1} parent=11 // pred_region
        _
      $region28: #{vit_forward.1} parent=11 // pred_fallthru
        _
      // Predicated region
      $region29: #{vit_forward.1} parent=11 // pred_check
        %p582 = pneg %p445
      $region30: #{vit_forward.1} parent=11 // pred_check_branch
        %584 = sbr.rel (%p582) target = $region32
      $region31: #{vit_forward.1} parent=11 // pred_region
        _
      $region32: #{vit_forward.1} parent=11 // pred_fallthru
        _
      // Predicated region
      $region33: #{vit_forward.1} parent=11 // pred_check
        %p585 = pneg %p466
      $region34: #{vit_forward.1} parent=11 // pred_check_branch
        %587 = sbr.rel (%p585) target = $region36
      $region35: #{vit_forward.1} parent=11 // pred_region
        _
      $region36: #{vit_forward.1} parent=11 // pred_fallthru
        _
      // Predicated region
      $region37: #{vit_forward.1} parent=11 // pred_check
        %p588 = pneg %p487
      $region38: #{vit_forward.1} parent=11 // pred_check_branch
        %590 = sbr.rel (%p588) target = $region40
      $region39: #{vit_forward.1} parent=11 // pred_region
        _
      $region40: #{vit_forward.1} parent=11 // pred_fallthru
        _
      // Predicated region
      $region41: #{vit_forward.1} parent=11 // pred_check
        %p591 = pneg %p508
      $region42: #{vit_forward.1} parent=11 // pred_check_branch
        %593 = sbr.rel (%p591) target = $region44
      $region43: #{vit_forward.1} parent=11 // pred_region
        _
      $region44: #{vit_forward.1} parent=11 // pred_fallthru
        _
    $region12: #{vit_forward.1} parent=5 // pred_fallthru
      _
    %p594 = scmp.lt.s32.totalorder %s28, 12
    // Predicated region
    $region45: #{vit_forward.1} parent=5 // pred_check
      %p595 = pneg %p594
    $region46: #{vit_forward.1} parent=5 // pred_check_branch
      %597 = sbr.rel (%p595) target = $region48
    $region47: #{vit_forward.1} parent=5 // pred_region
      // Predicated region
      $region49: #{vit_forward.1} parent=47 // pred_check
        %p598 = pneg %p132
      $region50: #{vit_forward.1} parent=47 // pred_check_branch
        %600 = sbr.rel (%p598) target = $region52
      $region51: #{vit_forward.1} parent=47 // pred_region
        %p601 = scmp.lt.s32.totalorder %s28, 11
        %s602 = scalar_select %p601, %s28, 11
        %s603 = scalar_lea.vmem %s4, %s602
      $region52: #{vit_forward.1} parent=47 // pred_fallthru
        _
      // Predicated region
      $region53: #{vit_forward.1} parent=47 // pred_check
        %p604 = pneg %p158
      $region54: #{vit_forward.1} parent=47 // pred_check_branch
        %606 = sbr.rel (%p604) target = $region56
      $region55: #{vit_forward.1} parent=47 // pred_region
        %p607 = scmp.lt.s32.totalorder %s28, 11
        %s608 = scalar_select %p607, %s28, 11
        %s609 = scalar_lea.vmem %s5, %s608
      $region56: #{vit_forward.1} parent=47 // pred_fallthru
        _
      // Predicated region
      $region57: #{vit_forward.1} parent=47 // pred_check
        %p610 = pneg %p184
      $region58: #{vit_forward.1} parent=47 // pred_check_branch
        %612 = sbr.rel (%p610) target = $region60
      $region59: #{vit_forward.1} parent=47 // pred_region
        %p613 = scmp.lt.s32.totalorder %s28, 11
        %s614 = scalar_select %p613, %s28, 11
        %s615 = smul.addr %s614, 4
        %s616 = smul.addr %s615, 4
        %s617 = scalar_lea.vmem %s6, %s616
      $region60: #{vit_forward.1} parent=47 // pred_fallthru
        _
      // Predicated region
      $region61: #{vit_forward.1} parent=47 // pred_check
        %p618 = pneg %p210
      $region62: #{vit_forward.1} parent=47 // pred_check_branch
        %620 = sbr.rel (%p618) target = $region64
      $region63: #{vit_forward.1} parent=47 // pred_region
        %p621 = scmp.lt.s32.totalorder %s28, 11
        %s622 = scalar_select %p621, %s28, 11
        %s623 = scalar_lea.vmem %s7, %s622
      $region64: #{vit_forward.1} parent=47 // pred_fallthru
        _
      // Predicated region
      $region65: #{vit_forward.1} parent=47 // pred_check
        %p624 = pneg %p236
      $region66: #{vit_forward.1} parent=47 // pred_check_branch
        %626 = sbr.rel (%p624) target = $region68
      $region67: #{vit_forward.1} parent=47 // pred_region
        %p627 = scmp.lt.s32.totalorder %s28, 11
        %s628 = scalar_select %p627, %s28, 11
        %s629 = smul.addr %s628, 4
        %s630 = smul.addr %s629, 4
        %s631 = scalar_lea.vmem %s8, %s630
      $region68: #{vit_forward.1} parent=47 // pred_fallthru
        _
      // Predicated region
      $region69: #{vit_forward.1} parent=47 // pred_check
        %p632 = pneg %p262
      $region70: #{vit_forward.1} parent=47 // pred_check_branch
        %634 = sbr.rel (%p632) target = $region72
      $region71: #{vit_forward.1} parent=47 // pred_region
        %p635 = scmp.lt.s32.totalorder %s28, 11
        %s636 = scalar_select %p635, %s28, 11
        %s637 = scalar_lea.vmem %s9, %s636
      $region72: #{vit_forward.1} parent=47 // pred_fallthru
        _
      // Predicated region
      $region73: #{vit_forward.1} parent=47 // pred_check
        %p638 = pneg %p288
      $region74: #{vit_forward.1} parent=47 // pred_check_branch
        %640 = sbr.rel (%p638) target = $region76
      $region75: #{vit_forward.1} parent=47 // pred_region
        %p641 = scmp.lt.s32.totalorder %s28, 11
        %s642 = scalar_select %p641, %s28, 11
        %s643 = scalar_lea.vmem %s10, %s642
      $region76: #{vit_forward.1} parent=47 // pred_fallthru
        _
      // Predicated region
      $region77: #{vit_forward.1} parent=47 // pred_check
        %p644 = pneg %p314
      $region78: #{vit_forward.1} parent=47 // pred_check_branch
        %646 = sbr.rel (%p644) target = $region80
      $region79: #{vit_forward.1} parent=47 // pred_region
        %p647 = scmp.lt.s32.totalorder %s28, 11
        %s648 = scalar_select %p647, %s28, 11
        %s649 = scalar_lea.vmem %s11, %s648
      $region80: #{vit_forward.1} parent=47 // pred_fallthru
        _
      // Predicated region
      $region81: #{vit_forward.1} parent=47 // pred_check
        %p650 = pneg %p340
      $region82: #{vit_forward.1} parent=47 // pred_check_branch
        %652 = sbr.rel (%p650) target = $region84
      $region83: #{vit_forward.1} parent=47 // pred_region
        %p653 = scmp.lt.s32.totalorder %s28, 11
        %s654 = scalar_select %p653, %s28, 11
        %s655 = smul.addr %s654, 4
        %s656 = smul.addr %s655, 4
        %s657 = scalar_lea.vmem %s12, %s656
      $region84: #{vit_forward.1} parent=47 // pred_fallthru
        _
      // Predicated region
      $region85: #{vit_forward.1} parent=47 // pred_check
        %p658 = pneg %p366
      $region86: #{vit_forward.1} parent=47 // pred_check_branch
        %660 = sbr.rel (%p658) target = $region88
      $region87: #{vit_forward.1} parent=47 // pred_region
        %p661 = scmp.lt.s32.totalorder %s28, 11
        %s662 = scalar_select %p661, %s28, 11
        %s663 = scalar_lea.vmem %s13, %s662
      $region88: #{vit_forward.1} parent=47 // pred_fallthru
        _
      // Predicated region
      $region89: #{vit_forward.1} parent=47 // pred_check
        %p664 = pneg %p392
      $region90: #{vit_forward.1} parent=47 // pred_check_branch
        %666 = sbr.rel (%p664) target = $region92
      $region91: #{vit_forward.1} parent=47 // pred_region
        %p667 = scmp.lt.s32.totalorder %s28, 11
        %s668 = scalar_select %p667, %s28, 11
        %s669 = smul.addr %s668, 8
        %s670 = smul.addr %s669, 4
        %s671 = scalar_lea.vmem %s14, %s670
      $region92: #{vit_forward.1} parent=47 // pred_fallthru
        _
      // Predicated region
      $region93: #{vit_forward.1} parent=47 // pred_check
        %p672 = pneg %p418
      $region94: #{vit_forward.1} parent=47 // pred_check_branch
        %674 = sbr.rel (%p672) target = $region96
      $region95: #{vit_forward.1} parent=47 // pred_region
        %p675 = scmp.lt.s32.totalorder %s28, 11
        %s676 = scalar_select %p675, %s28, 11
        %s677 = scalar_lea.vmem %s15, %s676
      $region96: #{vit_forward.1} parent=47 // pred_fallthru
        _
    $region48: #{vit_forward.1} parent=5 // pred_fallthru
      _
    %p678 = scmp.le.s32.totalorder 1, %s28
    %p679 = scmp.lt.s32.totalorder %s28, 13
    %p680 = pnand %p678, %p679
    %p681 = pneg %p680
    // Predicated region
    $region97: #{vit_forward.1} parent=5 // pred_check
      _
    $region98: #{vit_forward.1} parent=5 // pred_check_branch
      %683 = sbr.rel (%p680) target = $region100
    $region99: #{vit_forward.1} parent=5 // pred_region
      %s684 = ssub.s32 %s28, 1
      %p685 = pneg %p49
      %p686 = pneg %p46
      %p687 = pneg %p70
      %p688 = pneg %p67
      %p689 = pneg %p91
      %p690 = pneg %p88
      %p691 = pneg %p112
      %p692 = pneg %p109
      %p693 = scmp.lt.s32.totalorder %s33, 11
      %s694 = scalar_select %p693, %s33, 11
      %s695 = scalar_lea.vmem %s4, %s694
      %p696 = pneg %p138
      %p697 = pneg %p135
      %p698 = scmp.lt.s32.totalorder %s33, 11
      %s699 = scalar_select %p698, %s33, 11
      %s700 = scalar_lea.vmem %s5, %s699
      %p701 = pneg %p164
      %p702 = pneg %p161
      %p703 = scmp.lt.s32.totalorder %s33, 11
      %s704 = scalar_select %p703, %s33, 11
      %s705 = smul.addr %s704, 4
      %s706 = smul.addr %s705, 4
      %s707 = scalar_lea.vmem %s6, %s706
      %p708 = pneg %p190
      %p709 = pneg %p187
      %p710 = scmp.lt.s32.totalorder %s33, 11
      %s711 = scalar_select %p710, %s33, 11
      %s712 = scalar_lea.vmem %s7, %s711
      %p713 = pneg %p216
      %p714 = pneg %p213
      %p715 = scmp.lt.s32.totalorder %s33, 11
      %s716 = scalar_select %p715, %s33, 11
      %s717 = smul.addr %s716, 4
      %s718 = smul.addr %s717, 4
      %s719 = scalar_lea.vmem %s8, %s718
      %p720 = pneg %p242
      %p721 = pneg %p239
      %p722 = scmp.lt.s32.totalorder %s33, 11
      %s723 = scalar_select %p722, %s33, 11
      %s724 = scalar_lea.vmem %s9, %s723
      %p725 = pneg %p268
      %p726 = pneg %p265
      %p727 = scmp.lt.s32.totalorder %s33, 11
      %s728 = scalar_select %p727, %s33, 11
      %s729 = scalar_lea.vmem %s10, %s728
      %p730 = pneg %p294
      %p731 = pneg %p291
      %p732 = scmp.lt.s32.totalorder %s33, 11
      %s733 = scalar_select %p732, %s33, 11
      %s734 = scalar_lea.vmem %s11, %s733
      %p735 = pneg %p320
      %p736 = pneg %p317
      %p737 = scmp.lt.s32.totalorder %s33, 11
      %s738 = scalar_select %p737, %s33, 11
      %s739 = smul.addr %s738, 4
      %s740 = smul.addr %s739, 4
      %s741 = scalar_lea.vmem %s12, %s740
      %p742 = pneg %p346
      %p743 = pneg %p343
      %p744 = scmp.lt.s32.totalorder %s33, 11
      %s745 = scalar_select %p744, %s33, 11
      %s746 = scalar_lea.vmem %s13, %s745
      %p747 = pneg %p372
      %p748 = pneg %p369
      %p749 = scmp.lt.s32.totalorder %s33, 11
      %s750 = scalar_select %p749, %s33, 11
      %s751 = smul.addr %s750, 8
      %s752 = smul.addr %s751, 4
      %s753 = scalar_lea.vmem %s14, %s752
      %p754 = pneg %p398
      %p755 = pneg %p395
      %p756 = scmp.lt.s32.totalorder %s33, 11
      %s757 = scalar_select %p756, %s33, 11
      %s758 = scalar_lea.vmem %s15, %s757
      %p759 = pneg %p424
      %p760 = pneg %p421
      %p761 = pneg %p445
      %p762 = pneg %p442
      %p763 = pneg %p466
      %p764 = pneg %p463
      %p765 = pneg %p487
      %p766 = pneg %p484
      %p767 = pneg %p508
      %p768 = pneg %p505
      %p769 = pneg %p534
      %p770 = pneg %p531
      %p771 = scmp.lt.s32.totalorder %s33, 11
      %s772 = scalar_select %p771, %s33, 11
      %s773 = smul.addr %s772, 2
      %s774 = smul.addr %s773, 8
      %s775 = scalar_lea.vmem %s20, %s774
      %p776 = pneg %p555
      %p777 = pneg %p552
      %p778 = scmp.lt.s32.totalorder %s33, 11
      %s779 = scalar_select %p778, %s33, 11
      %s780 = scalar_lea.vmem %s4, %s779
      %p781 = scmp.lt.s32.totalorder %s33, 11
      %s782 = scalar_select %p781, %s33, 11
      %s783 = scalar_lea.vmem %s5, %s782
      %p784 = scmp.lt.s32.totalorder %s33, 11
      %s785 = scalar_select %p784, %s33, 11
      %s786 = smul.addr %s785, 4
      %s787 = smul.addr %s786, 4
      %s788 = scalar_lea.vmem %s6, %s787
      %p789 = scmp.lt.s32.totalorder %s33, 11
      %s790 = scalar_select %p789, %s33, 11
      %s791 = scalar_lea.vmem %s7, %s790
      %p792 = scmp.lt.s32.totalorder %s33, 11
      %s793 = scalar_select %p792, %s33, 11
      %s794 = smul.addr %s793, 4
      %s795 = smul.addr %s794, 4
      %s796 = scalar_lea.vmem %s8, %s795
      %p797 = scmp.lt.s32.totalorder %s33, 11
      %s798 = scalar_select %p797, %s33, 11
      %s799 = scalar_lea.vmem %s9, %s798
      %p800 = scmp.lt.s32.totalorder %s33, 11
      %s801 = scalar_select %p800, %s33, 11
      %s802 = scalar_lea.vmem %s10, %s801
      %p803 = scmp.lt.s32.totalorder %s33, 11
      %s804 = scalar_select %p803, %s33, 11
      %s805 = scalar_lea.vmem %s11, %s804
      %p806 = scmp.lt.s32.totalorder %s33, 11
      %s807 = scalar_select %p806, %s33, 11
      %s808 = smul.addr %s807, 4
      %s809 = smul.addr %s808, 4
      %s810 = scalar_lea.vmem %s12, %s809
      %p811 = scmp.lt.s32.totalorder %s33, 11
      %s812 = scalar_select %p811, %s33, 11
      %s813 = scalar_lea.vmem %s13, %s812
      %p814 = scmp.lt.s32.totalorder %s33, 11
      %s815 = scalar_select %p814, %s33, 11
      %s816 = smul.addr %s815, 8
      %s817 = smul.addr %s816, 4
      %s818 = scalar_lea.vmem %s14, %s817
      %p819 = scmp.lt.s32.totalorder %s33, 11
      %s820 = scalar_select %p819, %s33, 11
      %s821 = scalar_lea.vmem %s15, %s820
      %p822 = scmp.lt.s32.totalorder %s33, 11
      %s823 = scalar_select %p822, %s33, 11
      %s824 = smul.addr %s823, 2
      %s825 = smul.addr %s824, 8
      %s826 = scalar_lea.vmem %s20, %s825
      %p828 = scmp.eq.s32.totalorder %s33, 0
      // Predicated region
      $region101: #{vit_forward.1} parent=99 // pred_check
        %p829 = pneg %p828
      $region102: #{vit_forward.1} parent=99 // pred_check_branch
        %831 = sbr.rel (%p829) target = $region104
      $region103: #{vit_forward.1} parent=99 // pred_region
        %v832 = vld [vmem:[%s2] sm:$0xff]
        %v833 = vld [vmem:[%s2 + $0x8] sm:$0x3]
        %v834 = vld [vmem:[%s0] sm:$0xff]
        %v835 = vld [vmem:[%s0 + $0x8] sm:$0xff]
        %v836 = vld [vmem:[%s0 + $0x10] sm:$0xff]
        %v837 = vld [vmem:[%s0 + $0x18] sm:$0x11]
        %v838 = vld [vmem:[%s0 + $0x20] sm:$0x11]
        %v839 = vld [vmem:[%s0 + $0x28] sm:$0x11]
        %v840 = vld [vmem:[%s1] sm:$0xf]
        %v841 = vld [vmem:[%s1 + $0x4] sm:$0xf]
        %v842 = vld [vmem:[%s1 + $0x8] sm:$0xf]
        %v843 = vld [vmem:[%s1 + $0xc] sm:$0xf]
        %v844 = vld [vmem:[%s1 + $0x10] sm:$0xf]
        %v845 = vld [vmem:[%s1 + $0x14] sm:$0xf]
        %v846 = vld [vmem:[%s1 + $0x18] sm:$0xf]
        %v847 = vld [vmem:[%s1 + $0x1c] sm:$0xf]
        %v848 = vld [vmem:[%s1 + $0x20] sm:$0xf]
        %v849 = vld [vmem:[%s1 + $0x24] sm:$0xf]
        %v850 = vld [vmem:[%s1 + $0x28] sm:$0xf]
        %v851 = vld [vmem:[%s1 + $0x2c] sm:$0xf]
        %v852 = vld [vmem:[%s1 + $0x30] sm:$0xf]
        %v853 = vld [vmem:[%s1 + $0x34] sm:$0xf]
        %v854 = vld [vmem:[%s1 + $0x38] sm:$0xf]
        %v855 = vld [vmem:[%s1 + $0x3c] sm:$0xf]
        %v856 = vld [vmem:[%s1 + $0x40] sm:$0xf]
        %v857 = vld [vmem:[%s1 + $0x44] sm:$0xf]
        %v858 = vld [vmem:[%s1 + $0x48] sm:$0xf]
        %v859 = vld [vmem:[%s1 + $0x4c] sm:$0xf]
        %v860 = vld [vmem:[%s1 + $0x50] sm:$0xf]
        %v861 = vld [vmem:[%s1 + $0x54] sm:$0xf]
        %v862 = vld [vmem:[%s1 + $0x58] sm:$0xf]
        %v863 = vld [vmem:[%s1 + $0x5c] sm:$0xf]
        %v864 = vld [vmem:[%s1 + $0x60] sm:$0xf]
        %v865 = vld [vmem:[%s1 + $0x64] sm:$0xf]
        %v866 = vld [vmem:[%s1 + $0x68] sm:$0xf]
        %v867 = vld [vmem:[%s1 + $0x6c] sm:$0xf]
        %v868 = vld [vmem:[%s1 + $0x70] sm:$0xf]
        %v869 = vld [vmem:[%s1 + $0x74] sm:$0xf]
        %v870 = vld [vmem:[%s1 + $0x78] sm:$0xf]
        %v871 = vld [vmem:[%s1 + $0x7c] sm:$0xf]
        %v872 = vld [vmem:[%s1 + $0x80] sm:$0xf]
        %v873 = vld [vmem:[%s1 + $0x84] sm:$0xf]
        %v874 = vld [vmem:[%s1 + $0x88] sm:$0xf]
        %v875 = vld [vmem:[%s1 + $0x8c] sm:$0xf]
        %v876 = vld [vmem:[%s1 + $0x90] sm:$0xf]
        %v877 = vld [vmem:[%s1 + $0x94] sm:$0xf]
        %v878 = vld [vmem:[%s1 + $0x98] sm:$0xf]
        %v879 = vld [vmem:[%s1 + $0x9c] sm:$0xf]
        %v880 = vld [vmem:[%s1 + $0xa0] sm:$0xf]
        %v881 = vld [vmem:[%s1 + $0xa4] sm:$0xf]
        %v882 = vld [vmem:[%s1 + $0xa8] sm:$0xf]
        %v883 = vld [vmem:[%s1 + $0xac] sm:$0xf]
        %v884 = vld [vmem:[%s1 + $0xb0] sm:$0xf]
        %v885 = vld [vmem:[%s1 + $0xb4] sm:$0xf]
        %v886 = vld [vmem:[%s1 + $0xb8] sm:$0xf]
        %v887 = vld [vmem:[%s1 + $0xbc] sm:$0xf]
        %v888 = vld [vmem:[%s1 + $0xc0] sm:$0xf]
        %v889 = vld [vmem:[%s1 + $0xc4] sm:$0xf]
        %v890 = vld [vmem:[%s1 + $0xc8] sm:$0xf]
        %v891 = vld [vmem:[%s1 + $0xcc] sm:$0xf]
        %v892 = vld [vmem:[%s1 + $0xd0] sm:$0xf]
        %v893 = vld [vmem:[%s1 + $0xd4] sm:$0xf]
        %v894 = vld [vmem:[%s1 + $0xd8] sm:$0xf]
        %v895 = vld [vmem:[%s1 + $0xdc] sm:$0xf]
        %v896 = vld [vmem:[%s1 + $0xe0] sm:$0xf]
        %v897 = vld [vmem:[%s1 + $0xe4] sm:$0xf]
        %v898 = vld [vmem:[%s1 + $0xe8] sm:$0xf]
        %v899 = vld [vmem:[%s1 + $0xec] sm:$0xf]
        %v900 = vld [vmem:[%s1 + $0xf0] sm:$0xf]
        %v901 = vld [vmem:[%s1 + $0xf4] sm:$0xf]
        %v902 = vld [vmem:[%s1 + $0xf8] sm:$0xf]
        %v903 = vld [vmem:[%s1 + $0xfc] sm:$0xf]
        %v904 = vld [vmem:[%s1 + $0x100] sm:$0xf]
        %v905 = vld [vmem:[%s1 + $0x104] sm:$0xf]
        %v906 = vld [vmem:[%s1 + $0x108] sm:$0xf]
        %v907 = vld [vmem:[%s1 + $0x10c] sm:$0xf]
        %v908 = vld [vmem:[%s1 + $0x110] sm:$0xf]
        %v909 = vld [vmem:[%s1 + $0x114] sm:$0xf]
        %v910 = vld [vmem:[%s1 + $0x118] sm:$0xf]
        %v911 = vld [vmem:[%s1 + $0x11c] sm:$0xf]
        %v912 = vld [vmem:[%s1 + $0x120] sm:$0xf]
        %v913 = vld [vmem:[%s1 + $0x124] sm:$0xf]
        %v914 = vld [vmem:[%s1 + $0x128] sm:$0xf]
        %v915 = vld [vmem:[%s1 + $0x12c] sm:$0xf]
        %v916 = vld [vmem:[%s1 + $0x130] sm:$0xf]
        %v917 = vld [vmem:[%s1 + $0x134] sm:$0xf]
        %v918 = vld [vmem:[%s1 + $0x138] sm:$0xf]
        %v919 = vld [vmem:[%s1 + $0x13c] sm:$0xf]
        %v920 = vld [vmem:[%s1 + $0x140] sm:$0xf]
        %v921 = vld [vmem:[%s1 + $0x144] sm:$0xf]
        %v922 = vld [vmem:[%s1 + $0x148] sm:$0xf]
        %v923 = vld [vmem:[%s1 + $0x14c] sm:$0xf]
        %v924 = vld [vmem:[%s1 + $0x150] sm:$0xf]
        %v925 = vld [vmem:[%s1 + $0x154] sm:$0xf]
        %v926 = vld [vmem:[%s1 + $0x158] sm:$0xf]
        %v927 = vld [vmem:[%s1 + $0x15c] sm:$0xf]
        %v928 = vld [vmem:[%s1 + $0x160] sm:$0xf]
        %v929 = vld [vmem:[%s1 + $0x164] sm:$0xf]
        %v930 = vld [vmem:[%s1 + $0x168] sm:$0xf]
        %v931 = vld [vmem:[%s1 + $0x16c] sm:$0xf]
        %v932 = vld [vmem:[%s1 + $0x170] sm:$0xf]
        %v933 = vld [vmem:[%s1 + $0x174] sm:$0xf]
        %v934 = vld [vmem:[%s1 + $0x178] sm:$0xf]
        %v935 = vld [vmem:[%s1 + $0x17c] sm:$0xf]
        %v942 = vunpack.c.l.b16 %v834
        %v943 = vunpack.c.h.b16 %v834
        %v944 = vunpack.c.l.b16 %v835
        %v945 = vunpack.c.h.b16 %v835
        %v946 = vunpack.c.l.b16 %v836
        %v947 = vunpack.c.h.b16 %v836
        %v948 = vunpack.c.l.b16 %v837
        %v949 = vunpack.c.h.b16 %v837
        %v950 = vunpack.c.l.b16 %v838
        %v951 = vunpack.c.h.b16 %v838
        %v952 = vunpack.c.l.b16 %v839
        %v953 = vunpack.c.h.b16 %v839
        %v954 = vpack.c.b16 %v948, %v942
        %v955 = vpack.c.b16 %v949, %v943
        %v956 = vpack.c.b16 %v950, %v944
        %v957 = vpack.c.b16 %v951, %v945
        %v958 = vpack.c.b16 %v952, %v946
        %v959 = vpack.c.b16 %v953, %v947
        %v1062 = vunpack.c.l.b16 %v840
        %v1063 = vunpack.c.l.b16 %v841
        %v1064 = vunpack.c.l.b16 %v842
        %v1065 = vunpack.c.l.b16 %v843
        %v1066 = vunpack.c.l.b16 %v844
        %v1067 = vunpack.c.l.b16 %v845
        %v1068 = vunpack.c.l.b16 %v846
        %v1069 = vunpack.c.l.b16 %v847
        %v1070 = vunpack.c.l.b16 %v848
        %v1071 = vunpack.c.l.b16 %v849
        %v1072 = vunpack.c.l.b16 %v850
        %v1073 = vunpack.c.l.b16 %v851
        %v1074 = vunpack.c.l.b16 %v852
        %v1075 = vunpack.c.l.b16 %v853
        %v1076 = vunpack.c.l.b16 %v854
        %v1077 = vunpack.c.l.b16 %v855
        %v1078 = vunpack.c.l.b16 %v856
        %v1079 = vunpack.c.l.b16 %v857
        %v1080 = vunpack.c.l.b16 %v858
        %v1081 = vunpack.c.l.b16 %v859
        %v1082 = vunpack.c.l.b16 %v860
        %v1083 = vunpack.c.l.b16 %v861
        %v1084 = vunpack.c.l.b16 %v862
        %v1085 = vunpack.c.l.b16 %v863
        %v1086 = vunpack.c.l.b16 %v864
        %v1087 = vunpack.c.l.b16 %v865
        %v1088 = vunpack.c.l.b16 %v866
        %v1089 = vunpack.c.l.b16 %v867
        %v1090 = vunpack.c.l.b16 %v868
        %v1091 = vunpack.c.l.b16 %v869
        %v1092 = vunpack.c.l.b16 %v870
        %v1093 = vunpack.c.l.b16 %v871
        %v1094 = vunpack.c.l.b16 %v872
        %v1095 = vunpack.c.l.b16 %v873
        %v1096 = vunpack.c.l.b16 %v874
        %v1097 = vunpack.c.l.b16 %v875
        %v1098 = vunpack.c.l.b16 %v876
        %v1099 = vunpack.c.l.b16 %v877
        %v1100 = vunpack.c.l.b16 %v878
        %v1101 = vunpack.c.l.b16 %v879
        %v1102 = vunpack.c.l.b16 %v880
        %v1103 = vunpack.c.l.b16 %v881
        %v1104 = vunpack.c.l.b16 %v882
        %v1105 = vunpack.c.l.b16 %v883
        %v1106 = vunpack.c.l.b16 %v884
        %v1107 = vunpack.c.l.b16 %v885
        %v1108 = vunpack.c.l.b16 %v886
        %v1109 = vunpack.c.l.b16 %v887
        %v1110 = vunpack.c.l.b16 %v888
        %v1111 = vunpack.c.l.b16 %v889
        %v1112 = vunpack.c.l.b16 %v890
        %v1113 = vunpack.c.l.b16 %v891
        %v1114 = vunpack.c.l.b16 %v892
        %v1115 = vunpack.c.l.b16 %v893
        %v1116 = vunpack.c.l.b16 %v894
        %v1117 = vunpack.c.l.b16 %v895
        %v1118 = vunpack.c.l.b16 %v896
        %v1119 = vunpack.c.l.b16 %v897
        %v1120 = vunpack.c.l.b16 %v898
        %v1121 = vunpack.c.l.b16 %v899
        %v1122 = vunpack.c.l.b16 %v900
        %v1123 = vunpack.c.l.b16 %v901
        %v1124 = vunpack.c.l.b16 %v902
        %v1125 = vunpack.c.l.b16 %v903
        %v1126 = vunpack.c.l.b16 %v904
        %v1127 = vunpack.c.l.b16 %v905
        %v1128 = vunpack.c.l.b16 %v906
        %v1129 = vunpack.c.l.b16 %v907
        %v1130 = vunpack.c.l.b16 %v908
        %v1131 = vunpack.c.l.b16 %v909
        %v1132 = vunpack.c.l.b16 %v910
        %v1133 = vunpack.c.l.b16 %v911
        %v1134 = vunpack.c.l.b16 %v912
        %v1135 = vunpack.c.l.b16 %v913
        %v1136 = vunpack.c.l.b16 %v914
        %v1137 = vunpack.c.l.b16 %v915
        %v1138 = vunpack.c.l.b16 %v916
        %v1139 = vunpack.c.l.b16 %v917
        %v1140 = vunpack.c.l.b16 %v918
        %v1141 = vunpack.c.l.b16 %v919
        %v1142 = vunpack.c.l.b16 %v920
        %v1143 = vunpack.c.l.b16 %v921
        %v1144 = vunpack.c.l.b16 %v922
        %v1145 = vunpack.c.l.b16 %v923
        %v1146 = vunpack.c.l.b16 %v924
        %v1147 = vunpack.c.l.b16 %v925
        %v1148 = vunpack.c.l.b16 %v926
        %v1149 = vunpack.c.l.b16 %v927
        %v1150 = vunpack.c.l.b16 %v928
        %v1151 = vunpack.c.l.b16 %v929
        %v1152 = vunpack.c.l.b16 %v930
        %v1153 = vunpack.c.l.b16 %v931
        %v1154 = vunpack.c.l.b16 %v932
        %v1155 = vunpack.c.l.b16 %v933
        %v1156 = vunpack.c.l.b16 %v934
        %v1157 = vunpack.c.l.b16 %v935
        %v1158 = vpack.c.b16 %v1063, %v1062
        %v1159 = vpack.c.b16 %v1065, %v1064
        %v1160 = vpack.c.b16 %v1067, %v1066
        %v1161 = vpack.c.b16 %v1069, %v1068
        %v1162 = vpack.c.b16 %v1071, %v1070
        %v1163 = vpack.c.b16 %v1073, %v1072
        %v1164 = vpack.c.b16 %v1075, %v1074
        %v1165 = vpack.c.b16 %v1077, %v1076
        %v1166 = vpack.c.b16 %v1079, %v1078
        %v1167 = vpack.c.b16 %v1081, %v1080
        %v1168 = vpack.c.b16 %v1083, %v1082
        %v1169 = vpack.c.b16 %v1085, %v1084
        %v1170 = vpack.c.b16 %v1087, %v1086
        %v1171 = vpack.c.b16 %v1089, %v1088
        %v1172 = vpack.c.b16 %v1091, %v1090
        %v1173 = vpack.c.b16 %v1093, %v1092
        %v1174 = vpack.c.b16 %v1095, %v1094
        %v1175 = vpack.c.b16 %v1097, %v1096
        %v1176 = vpack.c.b16 %v1099, %v1098
        %v1177 = vpack.c.b16 %v1101, %v1100
        %v1178 = vpack.c.b16 %v1103, %v1102
        %v1179 = vpack.c.b16 %v1105, %v1104
        %v1180 = vpack.c.b16 %v1107, %v1106
        %v1181 = vpack.c.b16 %v1109, %v1108
        %v1182 = vpack.c.b16 %v1111, %v1110
        %v1183 = vpack.c.b16 %v1113, %v1112
        %v1184 = vpack.c.b16 %v1115, %v1114
        %v1185 = vpack.c.b16 %v1117, %v1116
        %v1186 = vpack.c.b16 %v1119, %v1118
        %v1187 = vpack.c.b16 %v1121, %v1120
        %v1188 = vpack.c.b16 %v1123, %v1122
        %v1189 = vpack.c.b16 %v1125, %v1124
        %v1190 = vpack.c.b16 %v1127, %v1126
        %v1191 = vpack.c.b16 %v1129, %v1128
        %v1192 = vpack.c.b16 %v1131, %v1130
        %v1193 = vpack.c.b16 %v1133, %v1132
        %v1194 = vpack.c.b16 %v1135, %v1134
        %v1195 = vpack.c.b16 %v1137, %v1136
        %v1196 = vpack.c.b16 %v1139, %v1138
        %v1197 = vpack.c.b16 %v1141, %v1140
        %v1198 = vpack.c.b16 %v1143, %v1142
        %v1199 = vpack.c.b16 %v1145, %v1144
        %v1200 = vpack.c.b16 %v1147, %v1146
        %v1201 = vpack.c.b16 %v1149, %v1148
        %v1202 = vpack.c.b16 %v1151, %v1150
        %v1203 = vpack.c.b16 %v1153, %v1152
        %v1204 = vpack.c.b16 %v1155, %v1154
        %v1205 = vpack.c.b16 %v1157, %v1156
        %1254 = vmatpush.bf16.msra.mxu0 %v1165
        %1255 = vmatpush.bf16.msra.mxu0 %v1164
        %1256 = vmatpush.bf16.msra.mxu0 %v1163
        %1257 = vmatpush.bf16.msra.mxu0 %v1162
        %1258 = vmatpush.bf16.msra.mxu0 %v1161
        %1259 = vmatpush.bf16.msra.mxu0 %v1160
        %1260 = vmatpush.bf16.msra.mxu0 %v1159
        %1261 = vmatpush.bf16.msra.mxu0 %v1158
        %1262 = vmatmul.bf16.gmra.mxu0 %v954
        %v1263 = vpop.f32.mrf.mxu0
        %v1264 = vadd.f32 0.0, %v1263
        %v1265 = vpop.f32.mrf.mxu0
        %v1266 = vadd.f32 0.0, %v1265
        %1267 = vdwg.mxu0
        %1268 = vmatpush.bf16.msra.mxu0 %v1173
        %1269 = vmatpush.bf16.msra.mxu0 %v1172
        %1270 = vmatpush.bf16.msra.mxu0 %v1171
        %1271 = vmatpush.bf16.msra.mxu0 %v1170
        %1272 = vmatpush.bf16.msra.mxu0 %v1169
        %1273 = vmatpush.bf16.msra.mxu0 %v1168
        %1274 = vmatpush.bf16.msra.mxu0 %v1167
        %1275 = vmatpush.bf16.msra.mxu0 %v1166
        %1276 = vmatmul.bf16.gmra.mxu0 %v955
        %v1277 = vpop.f32.mrf.mxu0
        %v1278 = vadd.f32 %v1264, %v1277
        %v1279 = vpop.f32.mrf.mxu0
        %v1280 = vadd.f32 %v1266, %v1279
        %1281 = vdwg.mxu0
        %1282 = vmatpush.bf16.msra.mxu0 %v1181
        %1283 = vmatpush.bf16.msra.mxu0 %v1180
        %1284 = vmatpush.bf16.msra.mxu0 %v1179
        %1285 = vmatpush.bf16.msra.mxu0 %v1178
        %1286 = vmatpush.bf16.msra.mxu0 %v1177
        %1287 = vmatpush.bf16.msra.mxu0 %v1176
        %1288 = vmatpush.bf16.msra.mxu0 %v1175
        %1289 = vmatpush.bf16.msra.mxu0 %v1174
        %1290 = vmatmul.bf16.gmra.mxu0 %v956
        %v1291 = vpop.f32.mrf.mxu0
        %v1292 = vadd.f32 %v1278, %v1291
        %v1293 = vpop.f32.mrf.mxu0
        %v1294 = vadd.f32 %v1280, %v1293
        %1295 = vdwg.mxu0
        %1296 = vmatpush.bf16.msra.mxu0 %v1189
        %1297 = vmatpush.bf16.msra.mxu0 %v1188
        %1298 = vmatpush.bf16.msra.mxu0 %v1187
        %1299 = vmatpush.bf16.msra.mxu0 %v1186
        %1300 = vmatpush.bf16.msra.mxu0 %v1185
        %1301 = vmatpush.bf16.msra.mxu0 %v1184
        %1302 = vmatpush.bf16.msra.mxu0 %v1183
        %1303 = vmatpush.bf16.msra.mxu0 %v1182
        %1304 = vmatmul.bf16.gmra.mxu0 %v957
        %v1305 = vpop.f32.mrf.mxu0
        %v1306 = vadd.f32 %v1292, %v1305
        %v1307 = vpop.f32.mrf.mxu0
        %v1308 = vadd.f32 %v1294, %v1307
        %1309 = vdwg.mxu0
        %1310 = vmatpush.bf16.msra.mxu0 %v1197
        %1311 = vmatpush.bf16.msra.mxu0 %v1196
        %1312 = vmatpush.bf16.msra.mxu0 %v1195
        %1313 = vmatpush.bf16.msra.mxu0 %v1194
        %1314 = vmatpush.bf16.msra.mxu0 %v1193
        %1315 = vmatpush.bf16.msra.mxu0 %v1192
        %1316 = vmatpush.bf16.msra.mxu0 %v1191
        %1317 = vmatpush.bf16.msra.mxu0 %v1190
        %1318 = vmatmul.bf16.gmra.mxu0 %v958
        %v1319 = vpop.f32.mrf.mxu0
        %v1320 = vadd.f32 %v1306, %v1319
        %v1321 = vpop.f32.mrf.mxu0
        %v1322 = vadd.f32 %v1308, %v1321
        %1323 = vdwg.mxu0
        %1324 = vmatpush.bf16.msra.mxu0 %v1205
        %1325 = vmatpush.bf16.msra.mxu0 %v1204
        %1326 = vmatpush.bf16.msra.mxu0 %v1203
        %1327 = vmatpush.bf16.msra.mxu0 %v1202
        %1328 = vmatpush.bf16.msra.mxu0 %v1201
        %1329 = vmatpush.bf16.msra.mxu0 %v1200
        %1330 = vmatpush.bf16.msra.mxu0 %v1199
        %1331 = vmatpush.bf16.msra.mxu0 %v1198
        %1332 = vmatmul.bf16.gmra.mxu0 %v959
        %v1333 = vpop.f32.mrf.mxu0
        %v1334 = vadd.f32 %v1320, %v1333
        %v1335 = vpop.f32.mrf.mxu0
        %v1336 = vadd.f32 %v1322, %v1335
        %1337 = vdwg.mxu0
        %v1338 = vadd.f32 %v832, %v1334
        %v1339 = vadd.f32 %v833, %v1336
        %vm1340 = vcmask 261120
        %1341 = vst.msk [vmem:[#allocation2] sm:$0xff] %vm1340, %v1338
        %vm1342 = vcmask 254976
        %1343 = vst.msk [vmem:[#allocation2 + $0x8] sm:$0x3] %vm1342, %v1339
      $region104: #{vit_forward.1} parent=99 // pred_fallthru
        _
      %v1344 = vld [vmem:[#allocation2] sm:$0xff]
      %v1345 = vld [vmem:[#allocation2 + $0x8] sm:$0x3]
      %v1346 = vld [vmem:[%s780] sm:$0x1]
      %v1347 = vld [vmem:[%s783] sm:$0x1]
      %vm1348 = vcmask 261120
      %v1349 = vsel %vm1348, %v1344, 0.0
      %1350 = vadd.xlane.f32.xlu0 %v1349
      %v1351 = vpop.xlane.xlu0 %1350
      %vm1352 = vcmask 254976
      %v1353 = vsel %vm1352, %v1345, 0.0
      %1354 = vadd.xlane.f32.xlu0 %v1353
      %v1355 = vpop.xlane.xlu0 %1354
      %v1356 = vrcp.pop 32.0
      %v1357 = vmul.f32 32.0, %v1356
      %v1358 = vsub.f32 1.0, %v1357
      %v1359 = vmul.f32 %v1356, %v1358
      %v1360 = vadd.f32 %v1356, %v1359
      %vm1361 = vweird.f32 %v1356
      %v1362 = vsel %vm1361, %v1356, %v1360
      %v1363 = vmul.f32 %v1351, %v1362
      %v1364 = vmul.f32 %v1355, %v1362
      %v1365 = vsub.f32 %v1344, %v1363
      %v1366 = vsub.f32 %v1345, %v1364
      %v1367 = vmul.f32 %v1365, %v1365
      %v1368 = vmul.f32 %v1366, %v1366
      %v1369 = vsel %vm1348, %v1367, 0.0
      %1370 = vadd.xlane.f32.xlu0 %v1369
      %v1371 = vpop.xlane.xlu0 %1370
      %v1372 = vsel %vm1352, %v1368, 0.0
      %1373 = vadd.xlane.f32.xlu0 %v1372
      %v1374 = vpop.xlane.xlu0 %1373
      %v1375 = vmul.f32 %v1371, %v1362
      %v1376 = vmul.f32 %v1374, %v1362
      %v1377 = vadd.f32 %v1375, 1e-06
      %v1378 = vadd.f32 %v1376, 1e-06
      %v1379 = vrsqrt.pop %v1377
      %v1380 = vmul.f32 %v1379, %v1377
      %v1381 = vmul.f32 %v1380, %v1379
      %v1382 = vmul.f32 0.5, %v1381
      %v1383 = vsub.f32 1.5, %v1382
      %v1384 = vmul.f32 %v1379, %v1383
      %vm1385 = vweird.f32 %v1377
      %vm1386 = vweird.f32 %v1379
      %vm1387 = vmor %vm1385, %vm1386
      %v1388 = vsel %vm1387, %v1379, %v1384
      %v1389 = vrsqrt.pop %v1378
      %v1390 = vmul.f32 %v1389, %v1378
      %v1391 = vmul.f32 %v1390, %v1389
      %v1392 = vmul.f32 0.5, %v1391
      %v1393 = vsub.f32 1.5, %v1392
      %v1394 = vmul.f32 %v1389, %v1393
      %vm1395 = vweird.f32 %v1378
      %vm1396 = vweird.f32 %v1389
      %vm1397 = vmor %vm1395, %vm1396
      %v1398 = vsel %vm1397, %v1389, %v1394
      %v1399 = vmul.f32 %v1365, %v1388
      %v1400 = vmul.f32 %v1366, %v1398
      %v1402 = vperm.slane %v1346, 0
      %v1404 = vmul.f32 %v1399, %v1402
      %v1405 = vmul.f32 %v1400, %v1402
      %v1407 = vperm.slane %v1347, 0
      %v1409 = vadd.f32 %v1404, %v1407
      %v1410 = vadd.f32 %v1405, %v1407
      %v1411 = vpack.c.bf16 %v1410, %v1409
      %v1412 = vld [vmem:[%s788] sm:$0xf]
      %v1413 = vld [vmem:[%s788 + $0x4] sm:$0xf]
      %v1414 = vld [vmem:[%s788 + $0x8] sm:$0xf]
      %v1415 = vld [vmem:[%s788 + $0xc] sm:$0xf]
      %v1416 = vld [vmem:[%s791] sm:$0x1]
      %v1418 = vperm.slane %v1416, 0
      %v1424 = vunpack.c.l.b16 %v1412
      %v1425 = vunpack.c.l.b16 %v1413
      %v1426 = vunpack.c.l.b16 %v1414
      %v1427 = vunpack.c.l.b16 %v1415
      %v1428 = vpack.c.b16 %v1425, %v1424
      %v1429 = vpack.c.b16 %v1427, %v1426
      %v1433 = vsel %vm1348, %v1411, 0
      %1435 = vmatpush.bf16.msra.mxu0 0
      %1436 = vmatpush.bf16.msra.mxu0 0
      %1437 = vmatpush.bf16.msra.mxu0 0
      %1438 = vmatpush.bf16.msra.mxu0 0
      %1439 = vmatpush.bf16.msra.mxu0 0
      %1440 = vmatpush.bf16.msra.mxu0 0
      %1441 = vmatpush.bf16.msra.mxu0 %v1429
      %1442 = vmatpush.bf16.msra.mxu0 %v1428
      %1443 = vmatmul.bf16.gmra.mxu0 %v1433
      %v1444 = vpop.f32.mrf.mxu0
      %v1445 = vadd.f32 %v1418, %v1444
      %v1446 = vpop.f32.mrf.mxu0
      %v1447 = vadd.f32 %v1418, %v1446
      %1448 = vdwg.mxu0
      %v1449 = vpack.c.bf16 %v1445, %v1445
      %v1450 = vpack.c.bf16 %v1447, %v1447
      %v1451 = vld [vmem:[%s3] sm:$0xff]
      %v1452 = vld [vmem:[%s3 + $0x8] sm:$0x3]
      %v1455 = vunpack.c.l.b16 %v1449
      %v1456 = vunpack.c.l.b16 %v1450
      %v1457 = vpack.c.b16 %v1456, %v1455
      %1458 = vrot.lane.b32.xlu0 %v1457, 96
      %v1459 = vpop.permute.xlu0 %1458
      %vm1460 = vcmask 64512
      %v1462 = vsel %vm1460, %v1457, 0
      %v1465 = vsel %vm1460, %v1459, 0
      %1467 = vmatpush.bf16.xpose.msra.mxu0 0
      %1468 = vmatpush.bf16.xpose.msra.mxu0 0
      %1469 = vmatpush.bf16.xpose.msra.mxu0 0
      %1470 = vmatpush.bf16.xpose.msra.mxu0 0
      %1471 = vmatpush.bf16.xpose.msra.mxu0 0
      %1472 = vmatpush.bf16.xpose.msra.mxu0 0
      %1473 = vmatpush.bf16.xpose.msra.mxu0 0
      %1474 = vmatpush.bf16.xpose.msra.mxu0 %v1465
      %1475 = vmatmul.bf16.gmra.mxu0 %v1462
      %v1476 = vpop.f32.mrf.mxu0
      %v1477 = vadd.f32 0.0, %v1476
      %v1478 = vpop.f32.mrf.mxu0
      %v1479 = vadd.f32 0.0, %v1478
      %1480 = vdwg.mxu0
      %v1481 = vmul.f32 %v1477, 0.35355338
      %v1482 = vmul.f32 %v1479, 0.35355338
      %v1483 = vadd.f32 %v1481, %v1451
      %v1484 = vadd.f32 %v1482, %v1452
      %vm1485 = vcmask 80896
      %v1486 = vsel %vm1485, %v1483, -inf
      %1487 = vmax.xlane.f32.xlu0 %v1486
      %v1488 = vpop.xlane.xlu0 %1487
      %vm1489 = vcmask 74752
      %v1490 = vsel %vm1489, %v1484, -inf
      %1491 = vmax.xlane.f32.xlu0 %v1490
      %v1492 = vpop.xlane.xlu0 %1491
      %v1493 = vsub.f32 %v1483, %v1488
      %v1494 = vsub.f32 %v1484, %v1492
      %v1495 = vmul.f32 %v1493, 1.442695
      %v1496 = vpow.pop %v1495
      %v1497 = vmul.f32 %v1494, 1.442695
      %v1498 = vpow.pop %v1497
      %v1499 = vsel %vm1485, %v1496, 0.0
      %1500 = vadd.xlane.f32.xlu0 %v1499
      %v1501 = vpop.xlane.xlu0 %1500
      %v1502 = vsel %vm1489, %v1498, 0.0
      %1503 = vadd.xlane.f32.xlu0 %v1502
      %v1504 = vpop.xlane.xlu0 %1503
      %v1505 = vrcp.pop %v1501
      %v1506 = vrcp.pop %v1504
      %v1507 = vmul.f32 %v1496, %v1505
      %v1508 = vmul.f32 %v1498, %v1506
      %v1509 = vpack.c.bf16 %v1508, %v1507
      %1510 = vrot.lane.b32.xlu0 %v1457, 64
      %v1511 = vpop.permute.xlu0 %1510
      %v1513 = vsel %vm1485, %v1509, 0
      %vm1515 = vcmask 1044480
      %v1517 = vsel %vm1515, %v1511, 0
      %1519 = vmatpush.bf16.msra.mxu0 0
      %1520 = vmatpush.bf16.msra.mxu0 0
      %1521 = vmatpush.bf16.msra.mxu0 0
      %1522 = vmatpush.bf16.msra.mxu0 0
      %1523 = vmatpush.bf16.msra.mxu0 0
      %1524 = vmatpush.bf16.msra.mxu0 0
      %1525 = vmatpush.bf16.msra.mxu0 0
      %1526 = vmatpush.bf16.msra.mxu0 %v1517
      %1527 = vmatmul.bf16.gmra.mxu0 %v1513
      %v1528 = vpop.f32.mrf.mxu0
      %v1529 = vadd.f32 0.0, %v1528
      %v1530 = vpop.f32.mrf.mxu0
      %v1531 = vadd.f32 0.0, %v1530
      %1532 = vdwg.mxu0
      %1533 = vrot.lane.b32.xlu0 %v1457, 120
      %v1534 = vpop.permute.xlu0 %1533
      %1535 = vrot.lane.b32.xlu0 %v1457, 88
      %v1536 = vpop.permute.xlu0 %1535
      %v1538 = vsel %vm1460, %v1534, 0
      %v1541 = vsel %vm1460, %v1536, 0
      %1543 = vmatpush.bf16.xpose.msra.mxu0 0
      %1544 = vmatpush.bf16.xpose.msra.mxu0 0
      %1545 = vmatpush.bf16.xpose.msra.mxu0 0
      %1546 = vmatpush.bf16.xpose.msra.mxu0 0
      %1547 = vmatpush.bf16.xpose.msra.mxu0 0
      %1548 = vmatpush.bf16.xpose.msra.mxu0 0
      %1549 = vmatpush.bf16.xpose.msra.mxu0 0
      %1550 = vmatpush.bf16.xpose.msra.mxu0 %v1541
      %1551 = vmatmul.bf16.gmra.mxu0 %v1538
      %v1552 = vpop.f32.mrf.mxu0
      %v1553 = vadd.f32 0.0, %v1552
      %v1554 = vpop.f32.mrf.mxu0
      %v1555 = vadd.f32 0.0, %v1554
      %1556 = vdwg.mxu0
      %v1557 = vmul.f32 %v1553, 0.35355338
      %v1558 = vmul.f32 %v1555, 0.35355338
      %v1559 = vadd.f32 %v1557, %v1451
      %v1560 = vadd.f32 %v1558, %v1452
      %v1561 = vsel %vm1485, %v1559, -inf
      %1562 = vmax.xlane.f32.xlu0 %v1561
      %v1563 = vpop.xlane.xlu0 %1562
      %v1564 = vsel %vm1489, %v1560, -inf
      %1565 = vmax.xlane.f32.xlu0 %v1564
      %v1566 = vpop.xlane.xlu0 %1565
      %v1567 = vsub.f32 %v1559, %v1563
      %v1568 = vsub.f32 %v1560, %v1566
      %v1569 = vmul.f32 %v1567, 1.442695
      %v1570 = vpow.pop %v1569
      %v1571 = vmul.f32 %v1568, 1.442695
      %v1572 = vpow.pop %v1571
      %v1573 = vsel %vm1485, %v1570, 0.0
      %1574 = vadd.xlane.f32.xlu0 %v1573
      %v1575 = vpop.xlane.xlu0 %1574
      %v1576 = vsel %vm1489, %v1572, 0.0
      %1577 = vadd.xlane.f32.xlu0 %v1576
      %v1578 = vpop.xlane.xlu0 %1577
      %v1579 = vrcp.pop %v1575
      %v1580 = vrcp.pop %v1578
      %v1581 = vmul.f32 %v1570, %v1579
      %v1582 = vmul.f32 %v1572, %v1580
      %v1583 = vpack.c.bf16 %v1582, %v1581
      %1584 = vrot.lane.b32.xlu0 %v1457, 56
      %v1585 = vpop.permute.xlu0 %1584
      %v1587 = vsel %vm1485, %v1583, 0
      %v1590 = vsel %vm1515, %v1585, 0
      %1592 = vmatpush.bf16.msra.mxu0 0
      %1593 = vmatpush.bf16.msra.mxu0 0
      %1594 = vmatpush.bf16.msra.mxu0 0
      %1595 = vmatpush.bf16.msra.mxu0 0
      %1596 = vmatpush.bf16.msra.mxu0 0
      %1597 = vmatpush.bf16.msra.mxu0 0
      %1598 = vmatpush.bf16.msra.mxu0 0
      %1599 = vmatpush.bf16.msra.mxu0 %v1590
      %1600 = vmatmul.bf16.gmra.mxu0 %v1587
      %v1601 = vpop.f32.mrf.mxu0
      %v1602 = vadd.f32 0.0, %v1601
      %v1603 = vpop.f32.mrf.mxu0
      %v1604 = vadd.f32 0.0, %v1603
      %1605 = vdwg.mxu0
      %1606 = vrot.lane.b32.xlu0 %v1457, 112
      %v1607 = vpop.permute.xlu0 %1606
      %1608 = vrot.lane.b32.xlu0 %v1457, 80
      %v1609 = vpop.permute.xlu0 %1608
      %v1611 = vsel %vm1460, %v1607, 0
      %v1614 = vsel %vm1460, %v1609, 0
      %1616 = vmatpush.bf16.xpose.msra.mxu0 0
      %1617 = vmatpush.bf16.xpose.msra.mxu0 0
      %1618 = vmatpush.bf16.xpose.msra.mxu0 0
      %1619 = vmatpush.bf16.xpose.msra.mxu0 0
      %1620 = vmatpush.bf16.xpose.msra.mxu0 0
      %1621 = vmatpush.bf16.xpose.msra.mxu0 0
      %1622 = vmatpush.bf16.xpose.msra.mxu0 0
      %1623 = vmatpush.bf16.xpose.msra.mxu0 %v1614
      %1624 = vmatmul.bf16.gmra.mxu0 %v1611
      %v1625 = vpop.f32.mrf.mxu0
      %v1626 = vadd.f32 0.0, %v1625
      %v1627 = vpop.f32.mrf.mxu0
      %v1628 = vadd.f32 0.0, %v1627
      %1629 = vdwg.mxu0
      %v1630 = vmul.f32 %v1626, 0.35355338
      %v1631 = vmul.f32 %v1628, 0.35355338
      %v1632 = vadd.f32 %v1630, %v1451
      %v1633 = vadd.f32 %v1631, %v1452
      %v1634 = vsel %vm1485, %v1632, -inf
      %1635 = vmax.xlane.f32.xlu0 %v1634
      %v1636 = vpop.xlane.xlu0 %1635
      %v1637 = vsel %vm1489, %v1633, -inf
      %1638 = vmax.xlane.f32.xlu0 %v1637
      %v1639 = vpop.xlane.xlu0 %1638
      %v1640 = vsub.f32 %v1632, %v1636
      %v1641 = vsub.f32 %v1633, %v1639
      %v1642 = vmul.f32 %v1640, 1.442695
      %v1643 = vpow.pop %v1642
      %v1644 = vmul.f32 %v1641, 1.442695
      %v1645 = vpow.pop %v1644
      %v1646 = vsel %vm1485, %v1643, 0.0
      %1647 = vadd.xlane.f32.xlu0 %v1646
      %v1648 = vpop.xlane.xlu0 %1647
      %v1649 = vsel %vm1489, %v1645, 0.0
      %1650 = vadd.xlane.f32.xlu0 %v1649
      %v1651 = vpop.xlane.xlu0 %1650
      %v1652 = vrcp.pop %v1648
      %v1653 = vrcp.pop %v1651
      %v1654 = vmul.f32 %v1643, %v1652
      %v1655 = vmul.f32 %v1645, %v1653
      %v1656 = vpack.c.bf16 %v1655, %v1654
      %1657 = vrot.lane.b32.xlu0 %v1457, 48
      %v1658 = vpop.permute.xlu0 %1657
      %v1660 = vsel %vm1485, %v1656, 0
      %v1663 = vsel %vm1515, %v1658, 0
      %1665 = vmatpush.bf16.msra.mxu0 0
      %1666 = vmatpush.bf16.msra.mxu0 0
      %1667 = vmatpush.bf16.msra.mxu0 0
      %1668 = vmatpush.bf16.msra.mxu0 0
      %1669 = vmatpush.bf16.msra.mxu0 0
      %1670 = vmatpush.bf16.msra.mxu0 0
      %1671 = vmatpush.bf16.msra.mxu0 0
      %1672 = vmatpush.bf16.msra.mxu0 %v1663
      %1673 = vmatmul.bf16.gmra.mxu0 %v1660
      %v1674 = vpop.f32.mrf.mxu0
      %v1675 = vadd.f32 0.0, %v1674
      %v1676 = vpop.f32.mrf.mxu0
      %v1677 = vadd.f32 0.0, %v1676
      %1678 = vdwg.mxu0
      %1679 = vrot.lane.b32.xlu0 %v1457, 104
      %v1680 = vpop.permute.xlu0 %1679
      %1681 = vrot.lane.b32.xlu0 %v1457, 72
      %v1682 = vpop.permute.xlu0 %1681
      %v1684 = vsel %vm1460, %v1680, 0
      %v1687 = vsel %vm1460, %v1682, 0
      %1689 = vmatpush.bf16.xpose.msra.mxu0 0
      %1690 = vmatpush.bf16.xpose.msra.mxu0 0
      %1691 = vmatpush.bf16.xpose.msra.mxu0 0
      %1692 = vmatpush.bf16.xpose.msra.mxu0 0
      %1693 = vmatpush.bf16.xpose.msra.mxu0 0
      %1694 = vmatpush.bf16.xpose.msra.mxu0 0
      %1695 = vmatpush.bf16.xpose.msra.mxu0 0
      %1696 = vmatpush.bf16.xpose.msra.mxu0 %v1687
      %1697 = vmatmul.bf16.gmra.mxu0 %v1684
      %v1698 = vpop.f32.mrf.mxu0
      %v1699 = vadd.f32 0.0, %v1698
      %v1700 = vpop.f32.mrf.mxu0
      %v1701 = vadd.f32 0.0, %v1700
      %1702 = vdwg.mxu0
      %v1703 = vmul.f32 %v1699, 0.35355338
      %v1704 = vmul.f32 %v1701, 0.35355338
      %v1705 = vadd.f32 %v1703, %v1451
      %v1706 = vadd.f32 %v1704, %v1452
      %v1707 = vsel %vm1485, %v1705, -inf
      %1708 = vmax.xlane.f32.xlu0 %v1707
      %v1709 = vpop.xlane.xlu0 %1708
      %v1710 = vsel %vm1489, %v1706, -inf
      %1711 = vmax.xlane.f32.xlu0 %v1710
      %v1712 = vpop.xlane.xlu0 %1711
      %v1713 = vsub.f32 %v1705, %v1709
      %v1714 = vsub.f32 %v1706, %v1712
      %v1715 = vmul.f32 %v1713, 1.442695
      %v1716 = vpow.pop %v1715
      %v1717 = vmul.f32 %v1714, 1.442695
      %v1718 = vpow.pop %v1717
      %v1719 = vsel %vm1485, %v1716, 0.0
      %1720 = vadd.xlane.f32.xlu0 %v1719
      %v1721 = vpop.xlane.xlu0 %1720
      %v1722 = vsel %vm1489, %v1718, 0.0
      %1723 = vadd.xlane.f32.xlu0 %v1722
      %v1724 = vpop.xlane.xlu0 %1723
      %v1725 = vrcp.pop %v1721
      %v1726 = vrcp.pop %v1724
      %v1727 = vmul.f32 %v1716, %v1725
      %v1728 = vmul.f32 %v1718, %v1726
      %v1729 = vpack.c.bf16 %v1728, %v1727
      %1730 = vrot.lane.b32.xlu0 %v1457, 40
      %v1731 = vpop.permute.xlu0 %1730
      %v1733 = vsel %vm1485, %v1729, 0
      %v1736 = vsel %vm1515, %v1731, 0
      %1738 = vmatpush.bf16.msra.mxu0 0
      %1739 = vmatpush.bf16.msra.mxu0 0
      %1740 = vmatpush.bf16.msra.mxu0 0
      %1741 = vmatpush.bf16.msra.mxu0 0
      %1742 = vmatpush.bf16.msra.mxu0 0
      %1743 = vmatpush.bf16.msra.mxu0 0
      %1744 = vmatpush.bf16.msra.mxu0 0
      %1745 = vmatpush.bf16.msra.mxu0 %v1736
      %1746 = vmatmul.bf16.gmra.mxu0 %v1733
      %v1747 = vpop.f32.mrf.mxu0
      %v1748 = vadd.f32 0.0, %v1747
      %v1749 = vpop.f32.mrf.mxu0
      %v1750 = vadd.f32 0.0, %v1749
      %1751 = vdwg.mxu0
      %1754 = vrot.lane.b32.xlu0 %v1602, 8
      %v1755 = vpop.permute.xlu0 %1754
      %1756 = vrot.lane.b32.xlu0 %v1604, 8
      %v1757 = vpop.permute.xlu0 %1756
      %1762 = vrot.lane.b32.xlu0 %v1675, 16
      %v1763 = vpop.permute.xlu0 %1762
      %1764 = vrot.lane.b32.xlu0 %v1677, 16
      %v1765 = vpop.permute.xlu0 %1764
      %1770 = vrot.lane.b32.xlu0 %v1748, 24
      %v1771 = vpop.permute.xlu0 %1770
      %1772 = vrot.lane.b32.xlu0 %v1750, 24
      %v1773 = vpop.permute.xlu0 %1772
      %v1776 = vsel %vm1460, %v1529, %v1755
      %v1777 = vsel %vm1460, %v1531, %v1757
      %vm1778 = vcmask 130048
      %v1779 = vsel %vm1778, %v1776, %v1763
      %v1780 = vsel %vm1778, %v1777, %v1765
      %vm1781 = vcmask 195584
      %v1782 = vsel %vm1781, %v1779, %v1771
      %v1783 = vsel %vm1781, %v1780, %v1773
      %v1784 = vpack.c.bf16 %v1783, %v1782
      %v1785 = vld [vmem:[%s796] sm:$0xf]
      %v1786 = vld [vmem:[%s796 + $0x4] sm:$0xf]
      %v1787 = vld [vmem:[%s796 + $0x8] sm:$0xf]
      %v1788 = vld [vmem:[%s796 + $0xc] sm:$0xf]
      %v1793 = vunpack.c.l.b16 %v1785
      %v1794 = vunpack.c.l.b16 %v1786
      %v1795 = vunpack.c.l.b16 %v1787
      %v1796 = vunpack.c.l.b16 %v1788
      %v1797 = vpack.c.b16 %v1794, %v1793
      %v1798 = vpack.c.b16 %v1796, %v1795
      %v1802 = vsel %vm1348, %v1784, 0
      %1804 = vmatpush.bf16.msra.mxu0 0
      %1805 = vmatpush.bf16.msra.mxu0 0
      %1806 = vmatpush.bf16.msra.mxu0 0
      %1807 = vmatpush.bf16.msra.mxu0 0
      %1808 = vmatpush.bf16.msra.mxu0 0
      %1809 = vmatpush.bf16.msra.mxu0 0
      %1810 = vmatpush.bf16.msra.mxu0 %v1798
      %1811 = vmatpush.bf16.msra.mxu0 %v1797
      %1812 = vmatmul.bf16.gmra.mxu0 %v1802
      %v1813 = vpop.f32.mrf.mxu0
      %v1814 = vadd.f32 0.0, %v1813
      %v1815 = vpop.f32.mrf.mxu0
      %v1816 = vadd.f32 0.0, %v1815
      %1817 = vdwg.mxu0
      %v1818 = vadd.f32 %v1344, %v1814
      %v1819 = vadd.f32 %v1345, %v1816
      %v1820 = vld [vmem:[%s799] sm:$0x1]
      %v1822 = vperm.slane %v1820, 0
      %v1824 = vadd.f32 %v1818, %v1822
      %v1825 = vadd.f32 %v1819, %v1822
      %v1826 = vld [vmem:[%s802] sm:$0x1]
      %v1827 = vld [vmem:[%s805] sm:$0x1]
      %v1828 = vsel %vm1348, %v1824, 0.0
      %1829 = vadd.xlane.f32.xlu0 %v1828
      %v1830 = vpop.xlane.xlu0 %1829
      %v1831 = vsel %vm1352, %v1825, 0.0
      %1832 = vadd.xlane.f32.xlu0 %v1831
      %v1833 = vpop.xlane.xlu0 %1832
      %v1834 = vmul.f32 %v1830, %v1362
      %v1835 = vmul.f32 %v1833, %v1362
      %v1836 = vsub.f32 %v1824, %v1834
      %v1837 = vsub.f32 %v1825, %v1835
      %v1838 = vmul.f32 %v1836, %v1836
      %v1839 = vmul.f32 %v1837, %v1837
      %v1840 = vsel %vm1348, %v1838, 0.0
      %1841 = vadd.xlane.f32.xlu0 %v1840
      %v1842 = vpop.xlane.xlu0 %1841
      %v1843 = vsel %vm1352, %v1839, 0.0
      %1844 = vadd.xlane.f32.xlu0 %v1843
      %v1845 = vpop.xlane.xlu0 %1844
      %v1846 = vmul.f32 %v1842, %v1362
      %v1847 = vmul.f32 %v1845, %v1362
      %v1848 = vadd.f32 %v1846, 1e-06
      %v1849 = vadd.f32 %v1847, 1e-06
      %v1850 = vrsqrt.pop %v1848
      %v1851 = vmul.f32 %v1850, %v1848
      %v1852 = vmul.f32 %v1851, %v1850
      %v1853 = vmul.f32 0.5, %v1852
      %v1854 = vsub.f32 1.5, %v1853
      %v1855 = vmul.f32 %v1850, %v1854
      %vm1856 = vweird.f32 %v1848
      %vm1857 = vweird.f32 %v1850
      %vm1858 = vmor %vm1856, %vm1857
      %v1859 = vsel %vm1858, %v1850, %v1855
      %v1860 = vrsqrt.pop %v1849
      %v1861 = vmul.f32 %v1860, %v1849
      %v1862 = vmul.f32 %v1861, %v1860
      %v1863 = vmul.f32 0.5, %v1862
      %v1864 = vsub.f32 1.5, %v1863
      %v1865 = vmul.f32 %v1860, %v1864
      %vm1866 = vweird.f32 %v1849
      %vm1867 = vweird.f32 %v1860
      %vm1868 = vmor %vm1866, %vm1867
      %v1869 = vsel %vm1868, %v1860, %v1865
      %v1870 = vmul.f32 %v1836, %v1859
      %v1871 = vmul.f32 %v1837, %v1869
      %v1873 = vperm.slane %v1826, 0
      %v1875 = vmul.f32 %v1870, %v1873
      %v1876 = vmul.f32 %v1871, %v1873
      %v1878 = vperm.slane %v1827, 0
      %v1880 = vadd.f32 %v1875, %v1878
      %v1881 = vadd.f32 %v1876, %v1878
      %v1882 = vpack.c.bf16 %v1881, %v1880
      %v1883 = vld [vmem:[%s810] sm:$0xf]
      %v1884 = vld [vmem:[%s810 + $0x4] sm:$0xf]
      %v1885 = vld [vmem:[%s810 + $0x8] sm:$0xf]
      %v1886 = vld [vmem:[%s810 + $0xc] sm:$0xf]
      %v1887 = vld [vmem:[%s813] sm:$0x1]
      %v1889 = vperm.slane %v1887, 0
      %v1895 = vunpack.c.l.b16 %v1883
      %v1896 = vunpack.c.l.b16 %v1884
      %v1897 = vunpack.c.l.b16 %v1885
      %v1898 = vunpack.c.l.b16 %v1886
      %v1899 = vpack.c.b16 %v1896, %v1895
      %v1900 = vpack.c.b16 %v1898, %v1897
      %v1904 = vsel %vm1348, %v1882, 0
      %1906 = vmatpush.bf16.msra.mxu0 0
      %1907 = vmatpush.bf16.msra.mxu0 0
      %1908 = vmatpush.bf16.msra.mxu0 0
      %1909 = vmatpush.bf16.msra.mxu0 0
      %1910 = vmatpush.bf16.msra.mxu0 0
      %1911 = vmatpush.bf16.msra.mxu0 0
      %1912 = vmatpush.bf16.msra.mxu0 %v1900
      %1913 = vmatpush.bf16.msra.mxu0 %v1899
      %1914 = vmatmul.bf16.gmra.mxu0 %v1904
      %v1915 = vpop.f32.mrf.mxu0
      %v1916 = vadd.f32 %v1889, %v1915
      %v1917 = vpop.f32.mrf.mxu0
      %v1918 = vadd.f32 %v1889, %v1917
      %1919 = vdwg.mxu0
      %v1920 = vmul.f32 %v1916, 0.5
      %v1921 = vmul.f32 %v1918, 0.5
      %v1922 = vmul.f32 %v1916, 0.70710677
      %v1923 = vmul.f32 %v1918, 0.70710677
      %v1924 = vmul.f32 %v1922, %v1922
      %v1925 = vmin.f32 16.0, %v1924
      %v1926 = vmul.f32 %v1925, 2.1237322e-06
      %v1927 = vadd.f32 %v1926, 0.00028619796
      %v1928 = vmul.f32 %v1925, %v1927
      %v1929 = vadd.f32 %v1928, 0.0036580483
      %v1930 = vmul.f32 %v1925, %v1929
      %v1931 = vadd.f32 %v1930, 0.05243302
      %v1932 = vmul.f32 %v1925, %v1931
      %v1933 = vadd.f32 %v1932, 0.18741608
      %v1934 = vmul.f32 %v1925, %v1933
      %v1935 = vadd.f32 %v1934, 1.1283791
      %v1936 = vmul.f32 %v1922, %v1935
      %v1937 = vmul.f32 %v1925, 3.8918573e-05
      %v1938 = vadd.f32 %v1937, 0.001143296
      %v1939 = vmul.f32 %v1925, %v1938
      %v1940 = vadd.f32 %v1939, 0.014752088
      %v1941 = vmul.f32 %v1925, %v1940
      %v1942 = vadd.f32 %v1941, 0.112945676
      %v1943 = vmul.f32 %v1925, %v1942
      %v1944 = vadd.f32 %v1943, 0.4994258
      %v1945 = vmul.f32 %v1925, %v1944
      %v1946 = vadd.f32 %v1945, 1.0
      %v1947 = vrcp.pop %v1946
      %v1948 = vmul.f32 %v1946, %v1947
      %v1949 = vsub.f32 1.0, %v1948
      %v1950 = vmul.f32 %v1947, %v1949
      %v1951 = vadd.f32 %v1947, %v1950
      %vm1952 = vweird.f32 %v1946
      %vm1953 = vweird.f32 %v1947
      %vm1954 = vmor %vm1952, %vm1953
      %v1955 = vsel %vm1954, %v1947, %v1951
      %v1956 = vand.u32 2147483647, %v1946
      %vm1957 = vcmp.eq.f32.partialorder %v1956, 8.507059e+37
      %v1958 = vand.u32 %v1946, 2147483648
      %v1959 = vor.u32 1.1754944e-38, %v1958
      %v1960 = vsel %vm1957, %v1959, %v1955
      %v1961 = vmul.f32 %v1936, %v1960
      %v1962 = vmin.f32 %v1961, 1.0
      %v1963 = vmax.f32 %v1962, -1.0
      %v1964 = vmul.f32 %v1923, %v1923
      %v1965 = vmin.f32 16.0, %v1964
      %v1966 = vmul.f32 %v1965, 2.1237322e-06
      %v1967 = vadd.f32 %v1966, 0.00028619796
      %v1968 = vmul.f32 %v1965, %v1967
      %v1969 = vadd.f32 %v1968, 0.0036580483
      %v1970 = vmul.f32 %v1965, %v1969
      %v1971 = vadd.f32 %v1970, 0.05243302
      %v1972 = vmul.f32 %v1965, %v1971
      %v1973 = vadd.f32 %v1972, 0.18741608
      %v1974 = vmul.f32 %v1965, %v1973
      %v1975 = vadd.f32 %v1974, 1.1283791
      %v1976 = vmul.f32 %v1923, %v1975
      %v1977 = vmul.f32 %v1965, 3.8918573e-05
      %v1978 = vadd.f32 %v1977, 0.001143296
      %v1979 = vmul.f32 %v1965, %v1978
      %v1980 = vadd.f32 %v1979, 0.014752088
      %v1981 = vmul.f32 %v1965, %v1980
      %v1982 = vadd.f32 %v1981, 0.112945676
      %v1983 = vmul.f32 %v1965, %v1982
      %v1984 = vadd.f32 %v1983, 0.4994258
      %v1985 = vmul.f32 %v1965, %v1984
      %v1986 = vadd.f32 %v1985, 1.0
      %v1987 = vrcp.pop %v1986
      %v1988 = vmul.f32 %v1986, %v1987
      %v1989 = vsub.f32 1.0, %v1988
      %v1990 = vmul.f32 %v1987, %v1989
      %v1991 = vadd.f32 %v1987, %v1990
      %vm1992 = vweird.f32 %v1986
      %vm1993 = vweird.f32 %v1987
      %vm1994 = vmor %vm1992, %vm1993
      %v1995 = vsel %vm1994, %v1987, %v1991
      %v1996 = vand.u32 2147483647, %v1986
      %vm1997 = vcmp.eq.f32.partialorder %v1996, 8.507059e+37
      %v1998 = vand.u32 %v1986, 2147483648
      %v1999 = vor.u32 1.1754944e-38, %v1998
      %v2000 = vsel %vm1997, %v1999, %v1995
      %v2001 = vmul.f32 %v1976, %v2000
      %v2002 = vmin.f32 %v2001, 1.0
      %v2003 = vmax.f32 %v2002, -1.0
      %v2004 = vadd.f32 %v1963, 1.0
      %v2005 = vadd.f32 %v2003, 1.0
      %v2006 = vmul.f32 %v1920, %v2004
      %v2007 = vmul.f32 %v1921, %v2005
      %v2008 = vpack.c.bf16 %v2007, %v2006
      %v2009 = vld [vmem:[%s818] sm:$0xf]
      %v2010 = vld [vmem:[%s818 + $0x4] sm:$0xf]
      %v2011 = vld [vmem:[%s818 + $0x8] sm:$0xf]
      %v2012 = vld [vmem:[%s818 + $0xc] sm:$0xf]
      %v2013 = vld [vmem:[%s818 + $0x10] sm:$0xf]
      %v2014 = vld [vmem:[%s818 + $0x14] sm:$0xf]
      %v2015 = vld [vmem:[%s818 + $0x18] sm:$0xf]
      %v2016 = vld [vmem:[%s818 + $0x1c] sm:$0xf]
      %v2025 = vunpack.c.l.b16 %v2009
      %v2026 = vunpack.c.l.b16 %v2010
      %v2027 = vunpack.c.l.b16 %v2011
      %v2028 = vunpack.c.l.b16 %v2012
      %v2029 = vunpack.c.l.b16 %v2013
      %v2030 = vunpack.c.l.b16 %v2014
      %v2031 = vunpack.c.l.b16 %v2015
      %v2032 = vunpack.c.l.b16 %v2016
      %v2033 = vpack.c.b16 %v2026, %v2025
      %v2034 = vpack.c.b16 %v2028, %v2027
      %v2035 = vpack.c.b16 %v2030, %v2029
      %v2036 = vpack.c.b16 %v2032, %v2031
      %vm2041 = vcmask 523264
      %v2043 = vsel %vm2041, %v2008, 0
      %2045 = vmatpush.bf16.msra.mxu0 0
      %2046 = vmatpush.bf16.msra.mxu0 0
      %2047 = vmatpush.bf16.msra.mxu0 0
      %2048 = vmatpush.bf16.msra.mxu0 0
      %2049 = vmatpush.bf16.msra.mxu0 %v2036
      %2050 = vmatpush.bf16.msra.mxu0 %v2035
      %2051 = vmatpush.bf16.msra.mxu0 %v2034
      %2052 = vmatpush.bf16.msra.mxu0 %v2033
      %2053 = vmatmul.bf16.gmra.mxu0 %v2043
      %v2054 = vpop.f32.mrf.mxu0
      %v2055 = vadd.f32 0.0, %v2054
      %v2056 = vpop.f32.mrf.mxu0
      %v2057 = vadd.f32 0.0, %v2056
      %2058 = vdwg.mxu0
      %v2059 = vadd.f32 %v1824, %v2055
      %v2060 = vadd.f32 %v1825, %v2057
      %v2061 = vld [vmem:[%s821] sm:$0x1]
      %v2063 = vperm.slane %v2061, 0
      %v2065 = vadd.f32 %v2059, %v2063
      %v2066 = vadd.f32 %v2060, %v2063
      %2067 = vst.msk [vmem:[#allocation2] sm:$0xff] %vm1348, %v2065
      %2068 = vst.msk [vmem:[#allocation2 + $0x8] sm:$0x3] %vm1352, %v2066
      %2069 = vst.msk [vmem:[%s826] sm:$0xff] %vm1348, %v2065
      %2070 = vst.msk [vmem:[%s826 + $0x8] sm:$0x3] %vm1352, %v2066
      %p2071 = scmp.eq.s32.totalorder %s33, 11
      // Predicated region
      $region105: #{vit_forward.1} parent=99 // pred_check
        %p2072 = pneg %p2071
      $region106: #{vit_forward.1} parent=99 // pred_check_branch
        %2074 = sbr.rel (%p2072) target = $region108
      $region107: #{vit_forward.1} parent=99 // pred_region
        %v2075 = vld [vmem:[%s16] sm:$0x1]
        %v2076 = vld [vmem:[%s17] sm:$0x1]
        %v2077 = vsel %vm1348, %v2065, 0.0
        %2078 = vadd.xlane.f32.xlu0 %v2077
        %v2079 = vpop.xlane.xlu0 %2078
        %v2080 = vsel %vm1352, %v2066, 0.0
        %2081 = vadd.xlane.f32.xlu0 %v2080
        %v2082 = vpop.xlane.xlu0 %2081
        %v2083 = vmul.f32 %v2079, %v1362
        %v2084 = vmul.f32 %v2082, %v1362
        %v2085 = vsub.f32 %v2065, %v2083
        %v2086 = vsub.f32 %v2066, %v2084
        %v2087 = vmul.f32 %v2085, %v2085
        %v2088 = vmul.f32 %v2086, %v2086
        %v2089 = vsel %vm1348, %v2087, 0.0
        %2090 = vadd.xlane.f32.xlu0 %v2089
        %v2091 = vpop.xlane.xlu0 %2090
        %v2092 = vsel %vm1352, %v2088, 0.0
        %2093 = vadd.xlane.f32.xlu0 %v2092
        %v2094 = vpop.xlane.xlu0 %2093
        %v2095 = vmul.f32 %v2091, %v1362
        %v2096 = vmul.f32 %v2094, %v1362
        %v2097 = vadd.f32 %v2095, 1e-06
        %v2098 = vadd.f32 %v2096, 1e-06
        %v2099 = vrsqrt.pop %v2097
        %v2100 = vmul.f32 %v2099, %v2097
        %v2101 = vmul.f32 %v2100, %v2099
        %v2102 = vmul.f32 0.5, %v2101
        %v2103 = vsub.f32 1.5, %v2102
        %v2104 = vmul.f32 %v2099, %v2103
        %vm2105 = vweird.f32 %v2097
        %vm2106 = vweird.f32 %v2099
        %vm2107 = vmor %vm2105, %vm2106
        %v2108 = vsel %vm2107, %v2099, %v2104
        %v2109 = vrsqrt.pop %v2098
        %v2110 = vmul.f32 %v2109, %v2098
        %v2111 = vmul.f32 %v2110, %v2109
        %v2112 = vmul.f32 0.5, %v2111
        %v2113 = vsub.f32 1.5, %v2112
        %v2114 = vmul.f32 %v2109, %v2113
        %vm2115 = vweird.f32 %v2098
        %vm2116 = vweird.f32 %v2109
        %vm2117 = vmor %vm2115, %vm2116
        %v2118 = vsel %vm2117, %v2109, %v2114
        %v2119 = vmul.f32 %v2085, %v2108
        %v2120 = vmul.f32 %v2086, %v2118
        %v2122 = vperm.slane %v2075, 0
        %v2124 = vmul.f32 %v2119, %v2122
        %v2125 = vmul.f32 %v2120, %v2122
        %v2127 = vperm.slane %v2076, 0
        %v2129 = vadd.f32 %v2124, %v2127
        %v2130 = vadd.f32 %v2125, %v2127
        %v2131 = vpack.c.bf16 %v2130, %v2129
        %v2132 = vld [vmem:[%s18] sm:$0xf]
        %v2133 = vld [vmem:[%s18 + $0x4] sm:$0xf]
        %v2134 = vld [vmem:[%s18 + $0x8] sm:$0xf]
        %v2135 = vld [vmem:[%s18 + $0xc] sm:$0xf]
        %v2136 = vld [vmem:[%s19] sm:$0x1]
        %v2138 = vperm.slane %v2136, 0
        %v2144 = vunpack.c.l.b16 %v2132
        %v2145 = vunpack.c.l.b16 %v2133
        %v2146 = vunpack.c.l.b16 %v2134
        %v2147 = vunpack.c.l.b16 %v2135
        %v2148 = vpack.c.b16 %v2145, %v2144
        %v2149 = vpack.c.b16 %v2147, %v2146
        %v2153 = vsel %vm1348, %v2131, 0
        %2155 = vmatpush.bf16.msra.mxu0 0
        %2156 = vmatpush.bf16.msra.mxu0 0
        %2157 = vmatpush.bf16.msra.mxu0 0
        %2158 = vmatpush.bf16.msra.mxu0 0
        %2159 = vmatpush.bf16.msra.mxu0 0
        %2160 = vmatpush.bf16.msra.mxu0 0
        %2161 = vmatpush.bf16.msra.mxu0 %v2149
        %2162 = vmatpush.bf16.msra.mxu0 %v2148
        %2163 = vmatmul.bf16.gmra.mxu0 %v2153
        %v2164 = vpop.f32.mrf.mxu0
        %v2165 = vadd.f32 %v2138, %v2164
        %v2166 = vpop.f32.mrf.mxu0
        %v2167 = vadd.f32 %v2138, %v2166
        %2168 = vdwg.mxu0
        %2169 = vst.msk [vmem:[%s21] sm:$0xff] %vm1485, %v2165
        %2170 = vst.msk [vmem:[%s21 + $0x8] sm:$0x3] %vm1489, %v2167
      $region108: #{vit_forward.1} parent=99 // pred_fallthru
        _
      %p2171 = scmp.lt.s32.totalorder %s33, 11
      %s2172 = scalar_select %p2171, %s33, 11
      %s2173 = smul.addr %s2172, 2
      %s2174 = smul.addr %s2173, 8
      %s2175 = scalar_lea.vmem %s20, %s2174
      // Predicated region
      $region109: #{vit_forward.1} parent=99 // pred_check
        %p2176 = pneg %p531
      $region110: #{vit_forward.1} parent=99 // pred_check_branch
        %2178 = sbr.rel (%p2176) target = $region112
      $region111: #{vit_forward.1} parent=99 // pred_region
        _
      $region112: #{vit_forward.1} parent=99 // pred_fallthru
        _
      // Predicated region
      $region113: #{vit_forward.1} parent=99 // pred_check
        %p2179 = pneg %p552
      $region114: #{vit_forward.1} parent=99 // pred_check_branch
        %2181 = sbr.rel (%p2179) target = $region116
      $region115: #{vit_forward.1} parent=99 // pred_region
        _
      $region116: #{vit_forward.1} parent=99 // pred_fallthru
        _
      // Predicated region
      $region117: #{vit_forward.1} parent=99 // pred_check
        %p2182 = pneg %p552
      $region118: #{vit_forward.1} parent=99 // pred_check_branch
        %2184 = sbr.rel (%p2182) target = $region120
      $region119: #{vit_forward.1} parent=99 // pred_region
        _
      $region120: #{vit_forward.1} parent=99 // pred_fallthru
        _
    $region100: #{vit_forward.1} parent=5 // pred_fallthru
      _
    %p2185 = scmp.le.s32.totalorder 2, %s28
    // Predicated region
    $region121: #{vit_forward.1} parent=5 // pred_check
      %p2186 = pneg %p2185
    $region122: #{vit_forward.1} parent=5 // pred_check_branch
      %2188 = sbr.rel (%p2186) target = $region124
    $region123: #{vit_forward.1} parent=5 // pred_region
      %s2189 = ssub.s32 %s28, 2
      // Predicated region
      $region125: #{vit_forward.1} parent=123 // pred_check
        %p2190 = pneg %p537
      $region126: #{vit_forward.1} parent=123 // pred_check_branch
        %2192 = sbr.rel (%p2190) target = $region128
      $region127: #{vit_forward.1} parent=123 // pred_region
        %p2193 = scmp.lt.s32.totalorder %s34, 11
        %s2194 = scalar_select %p2193, %s34, 11
        %s2195 = smul.addr %s2194, 2
        %s2196 = smul.addr %s2195, 8
        %s2197 = scalar_lea.vmem %s20, %s2196
      $region128: #{vit_forward.1} parent=123 // pred_fallthru
        _
    $region124: #{vit_forward.1} parent=5 // pred_fallthru
      _
  $region6: #{vit_forward.1} parent=0 // loop_footer
    %s32 = sadd.s32 1, %s28
  $region7: #{vit_forward.1} parent=0 // loop_footer_branch
    %27 = sbr.rel target = $region3
  $region8: #{vit_forward.1} parent=0 // loop_exit
    _

</llo_original>
